<compile_context>
chip_gen: v6e
topology: v6e:2x2x1
jax: 0.10.0
libtpu: 0.0.40
codegen_flags: <defaults>
</compile_context>

<pallas_src>
import functools

import jax
import jax.numpy as jnp
from jax.experimental import pallas as pl
from jax.experimental.pallas import tpu as pltpu


def _round_up(x, m):
    return (x + m - 1) // m * m


def _choose_hblk(h, wp, cin_p, cout_p, vmem_budget=8 * 1024 * 1024):
    """Pick an even output-row block size: big enough for lane/MXU efficiency,
    small enough for VMEM (v7x), and giving >=2 row blocks when H allows (grid parallelism)."""
    # Rough per-output-row VMEM footprint inside one grid step:
    # bf16 input rows + f32 (acc + matmul temp) at 3*cout_p lanes + f32 output rows.
    per_row = wp * (2 * cin_p + 2 * (3 * cout_p) * 4 + 4 * cout_p)
    cap = max(2, vmem_budget // per_row)
    hblk = min(_round_up(h, 2), cap)
    if h >= 4:  # prefer at least two row blocks so the grid is larger than N
        hblk = min(hblk, (h + 1) // 2)
    hblk = max(2, hblk - (hblk % 2))  # must be even (halo index map uses hblk//2)
    return hblk


def _conv3x3_kernel(xm_ref, xh_ref, w_ref, o_ref, xfull_ref, *, hblk, wp, cout_p, relu):
    # xm_ref   : (1, hblk*wp, cin_p)   main row block (flattened padded rows), bf16
    # xh_ref   : (1, 2*wp,    cin_p)   2-row halo directly below the main block, bf16
    # w_ref    : (3, cin_p, 3*cout_p)  weight slab [ky, ci, kx*cout_p + co], bf16
    # o_ref    : (1, hblk*wp, cout_p)  flattened output rows (cols >= W are junk), f32
    # xfull_ref: ((hblk+2)*wp, cin_p)  VMEM scratch: main rows + halo, contiguous
    m = hblk * wp
    cp = cout_p

    # Assemble the contiguous (hblk+2)-row input slab once (no per-tap reshapes).
    xfull_ref[pl.ds(0, m), :] = xm_ref[0]
    xfull_ref[pl.ds(m, 2 * wp), :] = xh_ref[0]

    # Three fat matmuls (one per ky): K = cin_p, N = 3*cout_p (kx fused on the lane axis).
    acc = jnp.zeros((m, 3 * cp), dtype=jnp.float32)
    for ky in range(3):
        r = xfull_ref[pl.ds(ky * wp, m), :]  # (m, cin_p) bf16, full-width rows, no reshape
        acc = acc + jnp.dot(r, w_ref[ky], preferred_element_type=jnp.float32)

    # Realign the three kx column blocks: out[mo] = acc[mo, 0:cp] + acc[mo+1, cp:2cp] + acc[mo+2, 2cp:3cp]
    # (the +kx row shift never crosses a padded-row boundary because wp >= W + 2).
    mo = m - 2
    out = acc[0:mo, 0:cp] + acc[1:mo + 1, cp:2 * cp] + acc[2:mo + 2, 2 * cp:3 * cp]
    if relu:
        out = jnp.maximum(out, 0.0)

    # Lane-dense (128-wide) stores; the last 2 flat rows map to discarded padding columns.
    o_ref[0, pl.ds(0, mo), :] = out.astype(o_ref.dtype)
    o_ref[0, pl.ds(mo, 2), :] = jnp.zeros((2, cp), dtype=o_ref.dtype)


def conv_layer_pallas(x_nchw, weight_oihw, relu=True):
    """Forward of ConvLayer: Conv2d(k=3, s=1, p=1, bias=False) [+ ReLU].

    x_nchw:      (N, Cin, H, W)    float32 (PyTorch layout)
    weight_oihw: (Cout, Cin, 3, 3) float32 (PyTorch layout)
    returns:     (N, Cout, H, W)   same dtype as x
    """
    n, cin, h, w = x_nchw.shape
    cout = weight_oihw.shape[0]
    assert weight_oihw.shape == (cout, cin, 3, 3)

    cin_p = _round_up(cin, 8)          # lane axis of the input / K of the matmul
    cout_p = _round_up(cout, 128)      # lane-dense output / matmul N building block
    wp = _round_up(w + 2, 8)           # padded row width (1 left halo + right zero pad)

    hblk = _choose_hblk(h, wp, cin_p, cout_p)
    h_eff = _round_up(h, hblk)
    n_h = h_eff // hblk
    m = hblk * wp

    # ---- glue: single fused transpose + bf16 cast + pad + flatten --------------------
    x = jnp.transpose(x_nchw, (0, 2, 3, 1)).astype(jnp.bfloat16)                # NHWC bf16
    x = jnp.pad(x, ((0, 0), (1, h_eff + 1 - h), (1, wp - 1 - w), (0, cin_p - cin)))
    x_flat = x.reshape(n, (h_eff + 2) * wp, cin_p)                              # flat padded rows

    wgt = jnp.transpose(weight_oihw, (2, 3, 1, 0)).astype(jnp.bfloat16)         # (3,3,Cin,Cout) HWIO
    wgt = jnp.pad(wgt, ((0, 0), (0, 0), (0, cin_p - cin), (0, cout_p - cout)))
    w_slab = jnp.transpose(wgt, (0, 2, 1, 3)).reshape(3, cin_p, 3 * cout_p)     # [ky, ci, kx*cout_p+co]

    kernel = functools.partial(_conv3x3_kernel, hblk=hblk, wp=wp, cout_p=cout_p, relu=relu)

    flops = 2 * n * h * w * cout * cin * 9
    bytes_accessed = x_flat.size * 2 + w_slab.size * 2 + n * h_eff * wp * cout_p * 4

    out_flat = pl.pallas_call(
        kernel,
        out_shape=jax.ShapeDtypeStruct((n, h_eff * wp, cout_p), jnp.float32),
        grid_spec=pltpu.PrefetchScalarGridSpec(
            num_scalar_prefetch=0,
            grid=(n, n_h),
            in_specs=[
                # main Hblk rows of this row block
                pl.BlockSpec((1, m, cin_p), lambda b, rb: (b, rb, 0)),
                # 2-row bottom halo (same array, different block view; hblk is even)
                pl.BlockSpec((1, 2 * wp, cin_p), lambda b, rb: (b, (rb + 1) * (hblk // 2), 0)),
                # full weight slab (constant block across the grid)
                pl.BlockSpec((3, cin_p, 3 * cout_p), lambda b, rb: (0, 0, 0)),
            ],
            out_specs=pl.BlockSpec((1, m, cout_p), lambda b, rb: (b, rb, 0)),
            scratch_shapes=[pltpu.VMEM(((hblk + 2) * wp, cin_p), jnp.bfloat16)],
        ),
        compiler_params=pltpu.CompilerParams(
            dimension_semantics=("parallel", "parallel"),
            vmem_limit_bytes=48 * 1024 * 1024,
        ),
        cost_estimate=pl.CostEstimate(
            flops=flops, transcendentals=0, bytes_accessed=bytes_accessed),
    )(x_flat, x_flat, w_slab)

    # ---- glue: un-flatten, drop padding, back to NCHW --------------------------------
    out = out_flat.reshape(n, h_eff, wp, cout_p)[:, :h, :w, :cout]
    return jnp.transpose(out, (0, 3, 1, 2)).astype(x_nchw.dtype)


if __name__ == "__main__":
    key = jax.random.PRNGKey(0)
    k_x, k_w = jax.random.split(key)

    N, Cin, Cout, H, W = 2, 4, 8, 16, 16

    x = jax.random.normal(k_x, (N, Cin, H, W), dtype=jnp.float32)
    fan_in = Cin * 3 * 3
    weight = jax.random.normal(k_w, (Cout, Cin, 3, 3), dtype=jnp.float32) * (2.0 / fan_in) ** 0.5

    out = jax.block_until_ready(conv_layer_pallas(x, weight, relu=True))
    assert out.shape == (N, Cout, H, W)

    # Reference on the same bf16-rounded operands (kernel uses bf16 MXU operands, f32 accumulation).
    x_r = x.astype(jnp.bfloat16).astype(jnp.float32)
    w_r = weight.astype(jnp.bfloat16).astype(jnp.float32)
    ref_lin = jax.lax.conv_general_dilated(
        x_r, w_r, window_strides=(1, 1), padding=((1, 1), (1, 1)),
        dimension_numbers=("NCHW", "OIHW", "NCHW"),
        precision=jax.lax.Precision.HIGHEST)
    ref_relu = jnp.maximum(ref_lin, 0.0)
    assert jnp.allclose(out, ref_relu, atol=1e-2, rtol=1e-2), float(jnp.max(jnp.abs(out - ref_relu)))

    # relu=False variant (previous version hard-asserted; now supported).
    out_lin = jax.block_until_ready(conv_layer_pallas(x, weight, relu=False))
    assert jnp.allclose(out_lin, ref_lin, atol=1e-2, rtol=1e-2)

    print("KERNEL_OK")
</pallas_src>

<mosaic_0001>
module attributes {stable_mosaic.version = 11 : i64} {
  func.func @_conv3x3_kernel(%arg0: i32, %arg1: i32, %arg2: memref<1x192x8xbf16, #tpu.memory_space<vmem>>, %arg3: memref<1x48x8xbf16, #tpu.memory_space<vmem>>, %arg4: memref<3x8x384xbf16, #tpu.memory_space<vmem>>, %arg5: memref<1x192x128xf32, #tpu.memory_space<vmem>>, %arg6: memref<240x8xbf16, #tpu.memory_space<vmem>>) attributes {dimension_semantics = [#tpu.dimension_semantics<parallel>, #tpu.dimension_semantics<parallel>], iteration_bounds = array<i64: 2, 2>, scalar_prefetch = 0 : i64, scratch_operands = 1 : i64, tpu.core_type = #tpu.core_type<tc>, window_params = [{transform_indices = @transform_0, window_bounds = array<i64: 1, 192, 8>}, {transform_indices = @transform_1, window_bounds = array<i64: 1, 48, 8>}, {pipeline_mode = #tpu.pipeline_mode<synchronous>, transform_indices = @transform_2, window_bounds = array<i64: 3, 8, 384>}, {transform_indices = @transform_3, window_bounds = array<i64: 1, 192, 128>}]} {
    %c0 = arith.constant 0 : index
    %c0_0 = arith.constant 0 : index
    %c0_1 = arith.constant 0 : index
    %0 = vector.load %arg2[%c0, %c0_0, %c0_1] : memref<1x192x8xbf16, #tpu.memory_space<vmem>>, vector<1x192x8xbf16>
    %1 = vector.shape_cast %0 : vector<1x192x8xbf16> to vector<192x8xbf16>
    %c0_2 = arith.constant 0 : index
    %c0_3 = arith.constant 0 : index
    %2 = vector.load %arg6[%c0_2, %c0_3] : memref<240x8xbf16, #tpu.memory_space<vmem>>, vector<192x8xbf16>
    tpu.vector_store %arg6[%c0_2, %c0_3], %1 {strides = array<i32>} : memref<240x8xbf16, #tpu.memory_space<vmem>>, vector<192x8xbf16>,
    %c0_4 = arith.constant 0 : index
    %c0_5 = arith.constant 0 : index
    %c0_6 = arith.constant 0 : index
    %3 = vector.load %arg3[%c0_4, %c0_5, %c0_6] : memref<1x48x8xbf16, #tpu.memory_space<vmem>>, vector<1x48x8xbf16>
    %4 = vector.shape_cast %3 : vector<1x48x8xbf16> to vector<48x8xbf16>
    %c192 = arith.constant 192 : index
    %c0_7 = arith.constant 0 : index
    %5 = vector.load %arg6[%c192, %c0_7] : memref<240x8xbf16, #tpu.memory_space<vmem>>, vector<48x8xbf16>
    tpu.vector_store %arg6[%c192, %c0_7], %4 {strides = array<i32>} : memref<240x8xbf16, #tpu.memory_space<vmem>>, vector<48x8xbf16>,
    %cst = arith.constant 0.000000e+00 : f32
    %6 = vector.broadcast %cst : f32 to vector<192x384xf32>
    %c0_8 = arith.constant 0 : index
    %c0_9 = arith.constant 0 : index
    %7 = vector.load %arg6[%c0_8, %c0_9] : memref<240x8xbf16, #tpu.memory_space<vmem>>, vector<192x8xbf16>
    %c0_10 = arith.constant 0 : index
    %c0_11 = arith.constant 0 : index
    %c0_12 = arith.constant 0 : index
    %8 = vector.load %arg4[%c0_10, %c0_11, %c0_12] : memref<3x8x384xbf16, #tpu.memory_space<vmem>>, vector<1x8x384xbf16>
    %9 = vector.shape_cast %8 : vector<1x8x384xbf16> to vector<8x384xbf16>
    %cst_13 = arith.constant dense<0.000000e+00> : vector<192x384xf32>
    %10 = tpu.matmul %7, %9, %cst_13 {dimension_numbers = #tpu.dot_dimension_numbers<[1], [0], [0], [1], [0, 0, 1, 1], [], []>} : vector<192x8xbf16>, vector<8x384xbf16>, vector<192x384xf32> -> vector<192x384xf32>
    %11 = arith.addf %6, %10 : vector<192x384xf32>
    %c24 = arith.constant 24 : index
    %c0_14 = arith.constant 0 : index
    %12 = vector.load %arg6[%c24, %c0_14] : memref<240x8xbf16, #tpu.memory_space<vmem>>, vector<192x8xbf16>
    %c1 = arith.constant 1 : index
    %c0_15 = arith.constant 0 : index
    %c0_16 = arith.constant 0 : index
    %13 = vector.load %arg4[%c1, %c0_15, %c0_16] : memref<3x8x384xbf16, #tpu.memory_space<vmem>>, vector<1x8x384xbf16>
    %14 = vector.shape_cast %13 : vector<1x8x384xbf16> to vector<8x384xbf16>
    %cst_17 = arith.constant dense<0.000000e+00> : vector<192x384xf32>
    %15 = tpu.matmul %12, %14, %cst_17 {dimension_numbers = #tpu.dot_dimension_numbers<[1], [0], [0], [1], [0, 0, 1, 1], [], []>} : vector<192x8xbf16>, vector<8x384xbf16>, vector<192x384xf32> -> vector<192x384xf32>
    %16 = arith.addf %11, %15 : vector<192x384xf32>
    %c48 = arith.constant 48 : index
    %c0_18 = arith.constant 0 : index
    %17 = vector.load %arg6[%c48, %c0_18] : memref<240x8xbf16, #tpu.memory_space<vmem>>, vector<192x8xbf16>
    %c2 = arith.constant 2 : index
    %c0_19 = arith.constant 0 : index
    %c0_20 = arith.constant 0 : index
    %18 = vector.load %arg4[%c2, %c0_19, %c0_20] : memref<3x8x384xbf16, #tpu.memory_space<vmem>>, vector<1x8x384xbf16>
    %19 = vector.shape_cast %18 : vector<1x8x384xbf16> to vector<8x384xbf16>
    %cst_21 = arith.constant dense<0.000000e+00> : vector<192x384xf32>
    %20 = tpu.matmul %17, %19, %cst_21 {dimension_numbers = #tpu.dot_dimension_numbers<[1], [0], [0], [1], [0, 0, 1, 1], [], []>} : vector<192x8xbf16>, vector<8x384xbf16>, vector<192x384xf32> -> vector<192x384xf32>
    %21 = arith.addf %16, %20 : vector<192x384xf32>
    %22 = vector.extract_strided_slice %21 {offsets = [0, 0], sizes = [190, 128], strides = [1, 1]} : vector<192x384xf32> to vector<190x128xf32>
    %23 = vector.extract_strided_slice %21 {offsets = [1, 128], sizes = [190, 128], strides = [1, 1]} : vector<192x384xf32> to vector<190x128xf32>
    %24 = arith.addf %22, %23 : vector<190x128xf32>
    %25 = vector.extract_strided_slice %21 {offsets = [2, 256], sizes = [190, 128], strides = [1, 1]} : vector<192x384xf32> to vector<190x128xf32>
    %26 = arith.addf %24, %25 : vector<190x128xf32>
    %cst_22 = arith.constant 0.000000e+00 : f32
    %27 = vector.broadcast %cst_22 : f32 to vector<190x128xf32>
    %28 = arith.maximumf %26, %27 : vector<190x128xf32>
    %c0_23 = arith.constant 0 : index
    %c0_24 = arith.constant 0 : index
    %c0_25 = arith.constant 0 : index
    %29 = vector.load %arg5[%c0_23, %c0_24, %c0_25] : memref<1x192x128xf32, #tpu.memory_space<vmem>>, vector<1x190x128xf32>
    %30 = vector.shape_cast %29 : vector<1x190x128xf32> to vector<190x128xf32>
    %31 = vector.shape_cast %28 : vector<190x128xf32> to vector<1x190x128xf32>
    tpu.vector_store %arg5[%c0_23, %c0_24, %c0_25], %31 {strides = array<i32>} : memref<1x192x128xf32, #tpu.memory_space<vmem>>, vector<1x190x128xf32>,
    %cst_26 = arith.constant 0.000000e+00 : f32
    %32 = vector.broadcast %cst_26 : f32 to vector<2x128xf32>
    %c0_27 = arith.constant 0 : index
    %c190 = arith.constant 190 : index
    %c0_28 = arith.constant 0 : index
    %33 = vector.load %arg5[%c0_27, %c190, %c0_28] : memref<1x192x128xf32, #tpu.memory_space<vmem>>, vector<1x2x128xf32>
    %34 = vector.shape_cast %33 : vector<1x2x128xf32> to vector<2x128xf32>
    %35 = vector.shape_cast %32 : vector<2x128xf32> to vector<1x2x128xf32>
    tpu.vector_store %arg5[%c0_27, %c190, %c0_28], %35 {strides = array<i32>} : memref<1x192x128xf32, #tpu.memory_space<vmem>>, vector<1x2x128xf32>,
    return
  }
  func.func @transform_0(%arg0: i32, %arg1: i32) -> (i32, i32, i32) {
    %c0_i32 = arith.constant 0 : i32
    %c0_i32_0 = arith.constant 0 : i32
    return %arg0, %arg1, %c0_i32 : i32, i32, i32
  }
  func.func @transform_1(%arg0: i32, %arg1: i32) -> (i32, i32, i32) {
    %c1_i32 = arith.constant 1 : i32
    %0 = arith.addi %arg1, %c1_i32 : i32
    %c4_i32 = arith.constant 4 : i32
    %1 = arith.muli %0, %c4_i32 : i32
    %c0_i32 = arith.constant 0 : i32
    %c0_i32_0 = arith.constant 0 : i32
    return %arg0, %1, %c0_i32 : i32, i32, i32
  }
  func.func @transform_2(%arg0: i32, %arg1: i32) -> (i32, i32, i32) {
    %c0_i32 = arith.constant 0 : i32
    %c0_i32_0 = arith.constant 0 : i32
    %c0_i32_1 = arith.constant 0 : i32
    %c0_i32_2 = arith.constant 0 : i32
    return %c0_i32, %c0_i32_0, %c0_i32_1 : i32, i32, i32
  }
  func.func @transform_3(%arg0: i32, %arg1: i32) -> (i32, i32, i32) {
    %c0_i32 = arith.constant 0 : i32
    %c0_i32_0 = arith.constant 0 : i32
    return %arg0, %arg1, %c0_i32 : i32, i32, i32
  }
}

</mosaic_0001>

<llo_original>
// kernel: tpu_custom_call.1
$region0: #{tpu_custom_call.1}
  #allocation0 [shape = 'u32[]', space=smem, size = 0x4, offset = 0x4, fixed_abs, tag = 'smem constant byte address 0x4 - core index']
  #allocation1 [shape = 'u32[144,128]{1,0:T(1,128)}', space=vmem, size = 0x12000, scoped, tag = 'internal scratch']
  #allocation2 [shape = 'bf16[240,8]{1,0:T(8,128)(2,1)}', space=vmem, size = 0xf000, scoped, tag = 'scratch operand']
  %s0 = inlined_call_operand.vmem [shape: bf16[2,432,8], index: 0, kind: input, shape index: {}]
  %s1 = inlined_call_operand.vmem [shape: bf16[2,432,8], index: 1, kind: input, shape index: {}]
  %s2 = inlined_call_operand.vmem [shape: bf16[3,8,384], index: 2, kind: input, shape index: {}]
  %s3 = inlined_call_operand.hbm [shape: f32[2,384,128], index: 3, kind: output, shape index: {}]
  %s4 = sld [smem:[#allocation0]]
  $region45: #{tpu_custom_call.1} parent=0
    _
  %s6 = ssub.s32 1, %s4
  %s7 = scalar_select 0, %s6, %s4
  $region1: #{tpu_custom_call.1} parent=0
    #allocation3 [shape = 'u8[196608]{0}', space=vmem, size = 0x30000, scoped, tag = 'output window, operand 0']
    #allocation4 [shape = 's32[2]{0}', space=sflag, size = 0x8, scoped, tag = 'scoped memory for tpu_custom_call.1']
    %8 = vsyncpa [#allocation4], 0
    %s9 = scalar_lea.sflag [#allocation4], 1
    %10 = vsyncpa %s9, 0
    loop: start=0, step=1, limit=6
    $region2: #{tpu_custom_call.1} parent=1 // loop_pre_header
      _
    $region3: #{tpu_custom_call.1} parent=1 // loop_header
      %s12 = sphi 0, %s16
      %p13 = scmp.ge.s32.totalorder %s12, 6
      %s19 = sphi 0, %s31
      %s20 = sphi 0, %s27
      %s21 = sphi 0, %s19
      %s22 = sphi 0, %s20
      %s23 = sphi 0, %s21
      %s24 = sphi 0, %s22
      %s36 = sphi 0, %s38
      %s39 = sphi 0, %s36
      %s40 = sphi 0, %s39
      %s56 = sphi 0, %s40
      %s68 = sphi 0, %s70
      %s71 = sphi 0, %s68
      %s72 = sphi 0, %s71
      %s88 = sphi 0, %s72
      %s92 = sphi 0, %s92
      %s94 = sphi 0, %s92
      %s95 = sphi 0, %s94
      %s109 = sphi 0, %s95
      %s117 = sphi 0, %s119
      %s120 = sphi 0, %s117
      %s121 = sphi 0, %s120
      %s137 = sphi 0, %s121
    $region4: #{tpu_custom_call.1} parent=1 // loop_header_branch
      %15 = sbr.rel (%p13) target = $region8
    $region5: #{tpu_custom_call.1} parent=1 // loop_body
      %s17 = ssub.s32 %s12, 1
      %s18 = ssub.s32 %s12, 2
      %s25 = sadd.s32 1, %s20
      %p26 = scmp.ge.s32.totalorder %s25, 2
      %s27 = scalar_select %p26, 0, %s25
      %s28 = sadd.s32 1, %s19
      %s29 = scalar_select %p26, %s28, %s19
      %p30 = scmp.ge.s32.totalorder %s29, 2
      %s31 = scalar_select %p30, 0, %s29
      %s32 = ssub.s32 %s19, %s31
      %s33 = ssub.s32 %s20, %s27
      %s34 = sor.u32 %s32, %s33
      %p35 = scmp.eq.s32.totalorder %s34, 0
      %s37 = sadd.s32 %s36, 1
      %s38 = scalar_select %p35, %s36, %s37
      %p41 = pneg %p35
      %p42 = scmp.eq.s32.totalorder %s12, 3
      %p43 = por %p41, %p42
      %p44 = scmp.ne.s32.totalorder %s36, %s39
      %p45 = scmp.eq.s32.totalorder %s12, 0
      %p46 = por %p44, %p45
      %p47 = scmp.ne.s32.totalorder %s36, %s39
      %p48 = scmp.eq.s32.totalorder %s17, 3
      %p49 = por %p47, %p48
      %p50 = scmp.ne.s32.totalorder %s39, %s40
      %p51 = scmp.eq.s32.totalorder %s17, 0
      %p52 = por %p50, %p51
      %p53 = scmp.ne.s32.totalorder %s39, %s40
      %p54 = scmp.eq.s32.totalorder %s18, 3
      %p55 = por %p53, %p54
      %p57 = scmp.ne.s32.totalorder %s40, %s56
      %p58 = scmp.eq.s32.totalorder %s18, 0
      %p59 = por %p57, %p58
      %s60 = sadd.s32 %s20, 1
      %s61 = smul.u32 %s60, 4
      %s62 = sadd.s32 %s27, 1
      %s63 = smul.u32 %s62, 4
      %s64 = ssub.s32 %s19, %s31
      %s65 = ssub.s32 %s61, %s63
      %s66 = sor.u32 %s64, %s65
      %p67 = scmp.eq.s32.totalorder %s66, 0
      %s69 = sadd.s32 %s68, 1
      %s70 = scalar_select %p67, %s68, %s69
      %p73 = pneg %p67
      %p74 = scmp.eq.s32.totalorder %s12, 3
      %p75 = por %p73, %p74
      %p76 = scmp.ne.s32.totalorder %s68, %s71
      %p77 = scmp.eq.s32.totalorder %s12, 0
      %p78 = por %p76, %p77
      %p79 = scmp.ne.s32.totalorder %s68, %s71
      %p80 = scmp.eq.s32.totalorder %s17, 3
      %p81 = por %p79, %p80
      %p82 = scmp.ne.s32.totalorder %s71, %s72
      %p83 = scmp.eq.s32.totalorder %s17, 0
      %p84 = por %p82, %p83
      %p85 = scmp.ne.s32.totalorder %s71, %s72
      %p86 = scmp.eq.s32.totalorder %s18, 3
      %p87 = por %p85, %p86
      %p89 = scmp.ne.s32.totalorder %s72, %s88
      %p90 = scmp.eq.s32.totalorder %s18, 0
      %p91 = por %p89, %p90
      %s93 = sadd.s32 %s92, 1
      %p96 = scmp.eq.s32.totalorder %s12, 3
      %p97 = scmp.ne.s32.totalorder %s92, %s94
      %p98 = scmp.eq.s32.totalorder %s12, 0
      %p99 = por %p97, %p98
      %p100 = scmp.ne.s32.totalorder %s92, %s94
      %p101 = scmp.eq.s32.totalorder %s17, 3
      %p102 = por %p100, %p101
      %p103 = scmp.ne.s32.totalorder %s94, %s95
      %p104 = scmp.eq.s32.totalorder %s17, 0
      %p105 = por %p103, %p104
      %p106 = scmp.ne.s32.totalorder %s94, %s95
      %p107 = scmp.eq.s32.totalorder %s18, 3
      %p108 = por %p106, %p107
      %p110 = scmp.ne.s32.totalorder %s95, %s109
      %p111 = scmp.eq.s32.totalorder %s18, 0
      %p112 = por %p110, %p111
      %s113 = ssub.s32 %s19, %s31
      %s114 = ssub.s32 %s20, %s27
      %s115 = sor.u32 %s113, %s114
      %p116 = scmp.eq.s32.totalorder %s115, 0
      %s118 = sadd.s32 %s117, 1
      %s119 = scalar_select %p116, %s117, %s118
      %p122 = pneg %p116
      %p123 = scmp.eq.s32.totalorder %s12, 3
      %p124 = por %p122, %p123
      %p125 = scmp.ne.s32.totalorder %s117, %s120
      %p126 = scmp.eq.s32.totalorder %s12, 0
      %p127 = por %p125, %p126
      %p128 = scmp.ne.s32.totalorder %s117, %s120
      %p129 = scmp.eq.s32.totalorder %s17, 3
      %p130 = por %p128, %p129
      %p131 = scmp.ne.s32.totalorder %s120, %s121
      %p132 = scmp.eq.s32.totalorder %s17, 0
      %p133 = por %p131, %p132
      %p134 = scmp.ne.s32.totalorder %s120, %s121
      %p135 = scmp.eq.s32.totalorder %s18, 3
      %p136 = por %p134, %p135
      %p138 = scmp.ne.s32.totalorder %s121, %s137
      %p139 = scmp.eq.s32.totalorder %s18, 0
      %p140 = por %p138, %p139
      %p141 = scmp.le.s32.totalorder 1, %s12
      %p142 = scmp.lt.s32.totalorder %s12, 5
      %p143 = pnand %p141, %p142
      %p144 = pneg %p143
      // Predicated region
      $region9: #{tpu_custom_call.1} parent=5 // pred_check
        _
      $region10: #{tpu_custom_call.1} parent=5 // pred_check_branch
        %146 = sbr.rel (%p143) target = $region12
      $region11: #{tpu_custom_call.1} parent=5 // pred_region
        %s147 = ssub.s32 %s12, 1
        // Predicated region
        $region13: #{tpu_custom_call.1} parent=11 // pred_check
          %p148 = pneg %p105
        $region14: #{tpu_custom_call.1} parent=11 // pred_check_branch
          %150 = sbr.rel (%p148) target = $region16
        $region15: #{tpu_custom_call.1} parent=11 // pred_region
          _
        $region16: #{tpu_custom_call.1} parent=11 // pred_fallthru
          _
      $region12: #{tpu_custom_call.1} parent=5 // pred_fallthru
        _
      %p151 = scmp.lt.s32.totalorder %s12, 4
      // Predicated region
      $region17: #{tpu_custom_call.1} parent=5 // pred_check
        %p152 = pneg %p151
      $region18: #{tpu_custom_call.1} parent=5 // pred_check_branch
        %154 = sbr.rel (%p152) target = $region20
      $region19: #{tpu_custom_call.1} parent=5 // pred_region
        // Predicated region
        $region21: #{tpu_custom_call.1} parent=19 // pred_check
          %p155 = pneg %p46
        $region22: #{tpu_custom_call.1} parent=19 // pred_check_branch
          %157 = sbr.rel (%p155) target = $region24
        $region23: #{tpu_custom_call.1} parent=19 // pred_region
          %s158 = smul.u32 24, %s20
          %s159 = ssub.s32 54, %s158
          %p160 = scmp.lt.s32.totalorder %s159, 24
          %s161 = scalar_select %p160, %s159, 24
          %s162 = smul.u32 64, %s161
          %p163 = scmp.lt.s32.totalorder %s19, 1
          %s164 = scalar_select %p163, %s19, 1
          %p165 = scmp.lt.s32.totalorder %s158, 53
          %s166 = scalar_select %p165, %s158, 53
          %s167 = smul.addr %s164, 54
          %s168 = sadd.s32 %s166, %s167
          %s169 = smul.addr %s168, 4
          %s170 = scalar_lea.vmem %s0, %s169
          %s171 = smul.u32 24, %s20
          %s172 = ssub.s32 54, %s171
          %p173 = scmp.lt.s32.totalorder %s172, 24
          %s174 = scalar_select %p173, %s172, 24
          %s175 = smul.u32 64, %s174
        $region24: #{tpu_custom_call.1} parent=19 // pred_fallthru
          _
        // Predicated region
        $region25: #{tpu_custom_call.1} parent=19 // pred_check
          %p176 = pneg %p78
        $region26: #{tpu_custom_call.1} parent=19 // pred_check_branch
          %178 = sbr.rel (%p176) target = $region28
        $region27: #{tpu_custom_call.1} parent=19 // pred_region
          %s179 = sadd.s32 %s20, 1
          %s180 = smul.u32 %s179, 4
          %s181 = smul.u32 6, %s180
          %p182 = scmp.lt.s32.totalorder %s19, 1
          %s183 = scalar_select %p182, %s19, 1
          %p184 = scmp.lt.s32.totalorder %s181, 53
          %s185 = scalar_select %p184, %s181, 53
          %s186 = smul.addr %s183, 54
          %s187 = sadd.s32 %s185, %s186
          %s188 = smul.addr %s187, 4
          %s189 = scalar_lea.vmem %s1, %s188
          %s190 = sadd.s32 %s20, 1
          %s191 = smul.u32 %s190, 4
          %s192 = smul.u32 6, %s191
        $region28: #{tpu_custom_call.1} parent=19 // pred_fallthru
          _
      $region20: #{tpu_custom_call.1} parent=5 // pred_fallthru
        _
      %p193 = scmp.le.s32.totalorder 1, %s12
      %p194 = scmp.lt.s32.totalorder %s12, 5
      %p195 = pnand %p193, %p194
      %p196 = pneg %p195
      // Predicated region
      $region29: #{tpu_custom_call.1} parent=5 // pred_check
        _
      $region30: #{tpu_custom_call.1} parent=5 // pred_check_branch
        %198 = sbr.rel (%p195) target = $region32
      $region31: #{tpu_custom_call.1} parent=5 // pred_region
        %s199 = ssub.s32 %s12, 1
        %s200 = smul.u32 24, %s22
        %s201 = ssub.s32 54, %s200
        %p202 = scmp.lt.s32.totalorder %s201, 24
        %s203 = scalar_select %p202, %s201, 24
        %s204 = smul.u32 64, %s203
        %p205 = scmp.lt.s32.totalorder %s21, 1
        %s206 = scalar_select %p205, %s21, 1
        %p207 = scmp.lt.s32.totalorder %s200, 53
        %s208 = scalar_select %p207, %s200, 53
        %s209 = smul.addr %s206, 54
        %s210 = sadd.s32 %s208, %s209
        %s211 = smul.addr %s210, 4
        %s212 = scalar_lea.vmem %s0, %s211
        %p213 = pneg %p52
        %p214 = pneg %p49
        %s215 = sadd.s32 %s22, 1
        %s216 = smul.u32 %s215, 4
        %s217 = smul.u32 6, %s216
        %p218 = scmp.lt.s32.totalorder %s21, 1
        %s219 = scalar_select %p218, %s21, 1
        %p220 = scmp.lt.s32.totalorder %s217, 53
        %s221 = scalar_select %p220, %s217, 53
        %s222 = smul.addr %s219, 54
        %s223 = sadd.s32 %s221, %s222
        %s224 = smul.addr %s223, 4
        %s225 = scalar_lea.vmem %s1, %s224
        %p226 = pneg %p84
        %p227 = pneg %p81
        %p228 = pneg %p105
        %p229 = pneg %p102
        %p230 = pneg %p133
        %p231 = pneg %p130
        %s232 = sand.u32 %s120, 1
        %s233 = scalar_lea.sflag [#allocation4], %s232
        %s234 = sand.u32 %s120, 1
        %s235 = smul.addr %s234, 192
        %s236 = scalar_lea.vmem [#allocation3], %s235
        %s237 = smul.u32 24, %s22
        %s238 = ssub.s32 54, %s237
        %p239 = scmp.lt.s32.totalorder %s238, 24
        %s240 = scalar_select %p239, %s238, 24
        %s241 = smul.u32 64, %s240
        %p242 = scmp.lt.s32.totalorder %s21, 1
        %s243 = scalar_select %p242, %s21, 1
        %p244 = scmp.lt.s32.totalorder %s237, 53
        %s245 = scalar_select %p244, %s237, 53
        %s246 = smul.addr %s243, 54
        %s247 = sadd.s32 %s245, %s246
        %s248 = smul.addr %s247, 4
        %s249 = scalar_lea.vmem %s0, %s248
        %s250 = smul.u32 24, %s22
        %s251 = ssub.s32 54, %s250
        %p252 = scmp.lt.s32.totalorder %s251, 24
        %s253 = scalar_select %p252, %s251, 24
        %s254 = smul.u32 64, %s253
        %s255 = sadd.s32 %s22, 1
        %s256 = smul.u32 %s255, 4
        %s257 = smul.u32 6, %s256
        %p258 = scmp.lt.s32.totalorder %s21, 1
        %s259 = scalar_select %p258, %s21, 1
        %p260 = scmp.lt.s32.totalorder %s257, 53
        %s261 = scalar_select %p260, %s257, 53
        %s262 = smul.addr %s259, 54
        %s263 = sadd.s32 %s261, %s262
        %s264 = smul.addr %s263, 4
        %s265 = scalar_lea.vmem %s1, %s264
        %s266 = sadd.s32 %s22, 1
        %s267 = smul.u32 %s266, 4
        %s268 = smul.u32 6, %s267
        %s269 = smul.u32 24, %s22
        %v271 = vld [vmem:[%s249] sm:$0xf]
        %v272 = vld [vmem:[%s249 + $0x4] sm:$0xf]
        %v273 = vld [vmem:[%s249 + $0x8] sm:$0xf]
        %v274 = vld [vmem:[%s249 + $0xc] sm:$0xf]
        %v275 = vld [vmem:[%s249 + $0x10] sm:$0xf]
        %v276 = vld [vmem:[%s249 + $0x14] sm:$0xf]
        %v277 = vld [vmem:[%s249 + $0x18] sm:$0xf]
        %v278 = vld [vmem:[%s249 + $0x1c] sm:$0xf]
        %v279 = vld [vmem:[%s249 + $0x20] sm:$0xf]
        %v280 = vld [vmem:[%s249 + $0x24] sm:$0xf]
        %v281 = vld [vmem:[%s249 + $0x28] sm:$0xf]
        %v282 = vld [vmem:[%s249 + $0x2c] sm:$0xf]
        %v283 = vld [vmem:[%s249 + $0x30] sm:$0xf]
        %v284 = vld [vmem:[%s249 + $0x34] sm:$0xf]
        %v285 = vld [vmem:[%s249 + $0x38] sm:$0xf]
        %v286 = vld [vmem:[%s249 + $0x3c] sm:$0xf]
        %v287 = vld [vmem:[%s249 + $0x40] sm:$0xf]
        %v288 = vld [vmem:[%s249 + $0x44] sm:$0xf]
        %v289 = vld [vmem:[%s249 + $0x48] sm:$0xf]
        %v290 = vld [vmem:[%s249 + $0x4c] sm:$0xf]
        %v291 = vld [vmem:[%s249 + $0x50] sm:$0xf]
        %v292 = vld [vmem:[%s249 + $0x54] sm:$0xf]
        %v293 = vld [vmem:[%s249 + $0x58] sm:$0xf]
        %v294 = vld [vmem:[%s249 + $0x5c] sm:$0xf]
        %vm295 = vcmask 60416
        %296 = vst.msk [vmem:[#allocation2] sm:$0xf] %vm295, %v271
        %297 = vst.msk [vmem:[#allocation2 + $0x4] sm:$0xf] %vm295, %v272
        %298 = vst.msk [vmem:[#allocation2 + $0x8] sm:$0xf] %vm295, %v273
        %299 = vst.msk [vmem:[#allocation2 + $0xc] sm:$0xf] %vm295, %v274
        %300 = vst.msk [vmem:[#allocation2 + $0x10] sm:$0xf] %vm295, %v275
        %301 = vst.msk [vmem:[#allocation2 + $0x14] sm:$0xf] %vm295, %v276
        %302 = vst.msk [vmem:[#allocation2 + $0x18] sm:$0xf] %vm295, %v277
        %303 = vst.msk [vmem:[#allocation2 + $0x1c] sm:$0xf] %vm295, %v278
        %304 = vst.msk [vmem:[#allocation2 + $0x20] sm:$0xf] %vm295, %v279
        %305 = vst.msk [vmem:[#allocation2 + $0x24] sm:$0xf] %vm295, %v280
        %306 = vst.msk [vmem:[#allocation2 + $0x28] sm:$0xf] %vm295, %v281
        %307 = vst.msk [vmem:[#allocation2 + $0x2c] sm:$0xf] %vm295, %v282
        %308 = vst.msk [vmem:[#allocation2 + $0x30] sm:$0xf] %vm295, %v283
        %309 = vst.msk [vmem:[#allocation2 + $0x34] sm:$0xf] %vm295, %v284
        %310 = vst.msk [vmem:[#allocation2 + $0x38] sm:$0xf] %vm295, %v285
        %311 = vst.msk [vmem:[#allocation2 + $0x3c] sm:$0xf] %vm295, %v286
        %312 = vst.msk [vmem:[#allocation2 + $0x40] sm:$0xf] %vm295, %v287
        %313 = vst.msk [vmem:[#allocation2 + $0x44] sm:$0xf] %vm295, %v288
        %314 = vst.msk [vmem:[#allocation2 + $0x48] sm:$0xf] %vm295, %v289
        %315 = vst.msk [vmem:[#allocation2 + $0x4c] sm:$0xf] %vm295, %v290
        %316 = vst.msk [vmem:[#allocation2 + $0x50] sm:$0xf] %vm295, %v291
        %317 = vst.msk [vmem:[#allocation2 + $0x54] sm:$0xf] %vm295, %v292
        %318 = vst.msk [vmem:[#allocation2 + $0x58] sm:$0xf] %vm295, %v293
        %319 = vst.msk [vmem:[#allocation2 + $0x5c] sm:$0xf] %vm295, %v294
        %v320 = vld [vmem:[%s265] sm:$0xf]
        %v321 = vld [vmem:[%s265 + $0x4] sm:$0xf]
        %v322 = vld [vmem:[%s265 + $0x8] sm:$0xf]
        %v323 = vld [vmem:[%s265 + $0xc] sm:$0xf]
        %v324 = vld [vmem:[%s265 + $0x10] sm:$0xf]
        %v325 = vld [vmem:[%s265 + $0x14] sm:$0xf]
        %326 = vst.msk [vmem:[#allocation2 + $0x60] sm:$0xf] %vm295, %v320
        %327 = vst.msk [vmem:[#allocation2 + $0x64] sm:$0xf] %vm295, %v321
        %328 = vst.msk [vmem:[#allocation2 + $0x68] sm:$0xf] %vm295, %v322
        %329 = vst.msk [vmem:[#allocation2 + $0x6c] sm:$0xf] %vm295, %v323
        %330 = vst.msk [vmem:[#allocation2 + $0x70] sm:$0xf] %vm295, %v324
        %331 = vst.msk [vmem:[#allocation2 + $0x74] sm:$0xf] %vm295, %v325
        %v332 = vld [vmem:[#allocation2] sm:$0xf]
        %v333 = vld [vmem:[#allocation2 + $0x4] sm:$0xf]
        %v334 = vld [vmem:[#allocation2 + $0x8] sm:$0xf]
        %v335 = vld [vmem:[#allocation2 + $0xc] sm:$0xf]
        %v336 = vld [vmem:[#allocation2 + $0x10] sm:$0xf]
        %v337 = vld [vmem:[#allocation2 + $0x14] sm:$0xf]
        %v338 = vld [vmem:[#allocation2 + $0x18] sm:$0xf]
        %v339 = vld [vmem:[#allocation2 + $0x1c] sm:$0xf]
        %v340 = vld [vmem:[#allocation2 + $0x20] sm:$0xf]
        %v341 = vld [vmem:[#allocation2 + $0x24] sm:$0xf]
        %v342 = vld [vmem:[#allocation2 + $0x28] sm:$0xf]
        %v343 = vld [vmem:[#allocation2 + $0x2c] sm:$0xf]
        %v344 = vld [vmem:[#allocation2 + $0x30] sm:$0xf]
        %v345 = vld [vmem:[#allocation2 + $0x34] sm:$0xf]
        %v346 = vld [vmem:[#allocation2 + $0x38] sm:$0xf]
        %v347 = vld [vmem:[#allocation2 + $0x3c] sm:$0xf]
        %v348 = vld [vmem:[#allocation2 + $0x40] sm:$0xf]
        %v349 = vld [vmem:[#allocation2 + $0x44] sm:$0xf]
        %v350 = vld [vmem:[#allocation2 + $0x48] sm:$0xf]
        %v351 = vld [vmem:[#allocation2 + $0x4c] sm:$0xf]
        %v352 = vld [vmem:[#allocation2 + $0x50] sm:$0xf]
        %v353 = vld [vmem:[#allocation2 + $0x54] sm:$0xf]
        %v354 = vld [vmem:[#allocation2 + $0x58] sm:$0xf]
        %v355 = vld [vmem:[#allocation2 + $0x5c] sm:$0xf]
        %v356 = vld [vmem:[%s2] sm:$0xff]
        %v357 = vld [vmem:[%s2 + $0x8] sm:$0xf]
        %v358 = vld [vmem:[#allocation2 + $0x60] sm:$0xf]
        %v359 = vld [vmem:[#allocation2 + $0x64] sm:$0xf]
        %v360 = vld [vmem:[#allocation2 + $0x68] sm:$0xf]
        %s361 = scalar_lea.vmem %s2, 12
        %v362 = vld [vmem:[%s361] sm:$0xff]
        %v363 = vld [vmem:[%s361 + $0x8] sm:$0xf]
        %v388 = vunpack.c.l.b16 %v335
        %v389 = vunpack.c.l.b16 %v336
        %v390 = vunpack.c.l.b16 %v337
        %v391 = vunpack.c.l.b16 %v338
        %v392 = vunpack.c.l.b16 %v339
        %v393 = vunpack.c.l.b16 %v340
        %v394 = vunpack.c.l.b16 %v341
        %v395 = vunpack.c.l.b16 %v342
        %v396 = vunpack.c.l.b16 %v343
        %v397 = vunpack.c.l.b16 %v344
        %v398 = vunpack.c.l.b16 %v345
        %v399 = vunpack.c.l.b16 %v346
        %v400 = vunpack.c.l.b16 %v347
        %v401 = vunpack.c.l.b16 %v348
        %v402 = vunpack.c.l.b16 %v349
        %v403 = vunpack.c.l.b16 %v350
        %v404 = vunpack.c.l.b16 %v351
        %v405 = vunpack.c.l.b16 %v352
        %v406 = vunpack.c.l.b16 %v353
        %v407 = vunpack.c.l.b16 %v354
        %v408 = vunpack.c.l.b16 %v355
        %v409 = vunpack.c.l.b16 %v358
        %v410 = vunpack.c.l.b16 %v359
        %v411 = vunpack.c.l.b16 %v360
        %v412 = vpack.c.b16 %v389, %v388
        %v413 = vpack.c.b16 %v391, %v390
        %v414 = vpack.c.b16 %v393, %v392
        %v415 = vpack.c.b16 %v395, %v394
        %v416 = vpack.c.b16 %v397, %v396
        %v417 = vpack.c.b16 %v399, %v398
        %v418 = vpack.c.b16 %v401, %v400
        %v419 = vpack.c.b16 %v403, %v402
        %v420 = vpack.c.b16 %v405, %v404
        %v421 = vpack.c.b16 %v407, %v406
        %v422 = vpack.c.b16 %v409, %v408
        %v423 = vpack.c.b16 %v411, %v410
        %v426 = vunpack.c.l.b16 %v362
        %v427 = vunpack.c.h.b16 %v362
        %v428 = vunpack.c.l.b16 %v363
        %v429 = vpack.c.b16 %v426, %v426
        %v430 = vpack.c.b16 %v427, %v427
        %v431 = vpack.c.b16 %v428, %v428
        %vm432 = vcmask 64512
        %v434 = vsel %vm432, %v412, 0
        %v437 = vsel %vm432, %v413, 0
        %v440 = vsel %vm432, %v414, 0
        %v443 = vsel %vm432, %v415, 0
        %v446 = vsel %vm432, %v416, 0
        %v449 = vsel %vm432, %v417, 0
        %v452 = vsel %vm432, %v418, 0
        %v455 = vsel %vm432, %v419, 0
        %v458 = vsel %vm432, %v420, 0
        %v461 = vsel %vm432, %v421, 0
        %v464 = vsel %vm432, %v422, 0
        %v467 = vsel %vm432, %v423, 0
        %vm469 = vcmask 1043456
        %v471 = vsel %vm469, %v429, 0
        %v474 = vsel %vm469, %v430, 0
        %v477 = vsel %vm469, %v431, 0
        %479 = vmatprep.subr.bf16.mxu0 0
        %480 = vmatpush1.bf16.msra.mxu0 0
        %481 = vmatprep.subr.bf16.mxu0 0
        %482 = vmatpush1.bf16.msra.mxu0 0
        %483 = vmatprep.subr.bf16.mxu0 0
        %484 = vmatpush1.bf16.msra.mxu0 0
        %485 = vmatprep.subr.bf16.mxu0 0
        %486 = vmatpush1.bf16.msra.mxu0 0
        %487 = vmatprep.subr.bf16.mxu0 0
        %488 = vmatpush1.bf16.msra.mxu0 0
        %489 = vmatprep.subr.bf16.mxu0 0
        %490 = vmatpush1.bf16.msra.mxu0 0
        %491 = vmatprep.subr.bf16.mxu0 0
        %492 = vmatpush1.bf16.msra.mxu0 0
        %493 = vmatprep.subr.bf16.mxu0 %v474
        %494 = vmatpush1.bf16.msra.mxu0 %v471
        %495 = vmatprep.subr.bf16.mxu0 0
        %496 = vmatpush2.bf16.msra.mxu0 0
        %497 = vmatprep.subr.bf16.mxu0 0
        %498 = vmatpush2.bf16.msra.mxu0 0
        %499 = vmatprep.subr.bf16.mxu0 0
        %500 = vmatpush2.bf16.msra.mxu0 0
        %501 = vmatprep.subr.bf16.mxu0 0
        %502 = vmatpush2.bf16.msra.mxu0 0
        %503 = vmatprep.subr.bf16.mxu0 0
        %504 = vmatpush2.bf16.msra.mxu0 0
        %505 = vmatprep.subr.bf16.mxu0 0
        %506 = vmatpush2.bf16.msra.mxu0 0
        %507 = vmatprep.subr.bf16.mxu0 0
        %508 = vmatpush2.bf16.msra.mxu0 0
        %509 = vmatprep.subr.bf16.mxu0 0
        %510 = vmatpush2.bf16.msra.mxu0 0
        %511 = vmatprep.mubr.bf16.mxu0 0
        %512 = vmatmul.mubr.bf16.gmra.mxu0 %v434
        %v513 = vpop.f32.mrf.mxu0
        %v514 = vadd.f32 0.0, %v513
        %v515 = vpop.f32.mrf.mxu0
        %v516 = vadd.f32 0.0, %v515
        %v517 = vpop.f32.mrf.mxu0
        %v518 = vadd.f32 0.0, %v517
        %v519 = vpop.f32.mrf.mxu0
        %v520 = vadd.f32 0.0, %v519
        %521 = vmatprep.mubr.bf16.mxu0 0
        %522 = vmatmul.mubr.bf16.gmra.mxu0 %v437
        %v523 = vpop.f32.mrf.mxu0
        %v524 = vadd.f32 0.0, %v523
        %v525 = vpop.f32.mrf.mxu0
        %v526 = vadd.f32 0.0, %v525
        %v527 = vpop.f32.mrf.mxu0
        %v528 = vadd.f32 0.0, %v527
        %v529 = vpop.f32.mrf.mxu0
        %v530 = vadd.f32 0.0, %v529
        %531 = vmatprep.mubr.bf16.mxu0 0
        %532 = vmatmul.mubr.bf16.gmra.mxu0 %v440
        %v533 = vpop.f32.mrf.mxu0
        %v534 = vadd.f32 0.0, %v533
        %v535 = vpop.f32.mrf.mxu0
        %v536 = vadd.f32 0.0, %v535
        %v537 = vpop.f32.mrf.mxu0
        %v538 = vadd.f32 0.0, %v537
        %v539 = vpop.f32.mrf.mxu0
        %v540 = vadd.f32 0.0, %v539
        %541 = vmatprep.mubr.bf16.mxu0 0
        %542 = vmatmul.mubr.bf16.gmra.mxu0 %v443
        %v543 = vpop.f32.mrf.mxu0
        %v544 = vadd.f32 0.0, %v543
        %v545 = vpop.f32.mrf.mxu0
        %v546 = vadd.f32 0.0, %v545
        %v547 = vpop.f32.mrf.mxu0
        %v548 = vadd.f32 0.0, %v547
        %v549 = vpop.f32.mrf.mxu0
        %v550 = vadd.f32 0.0, %v549
        %551 = vmatprep.mubr.bf16.mxu0 0
        %552 = vmatmul.mubr.bf16.gmra.mxu0 %v446
        %v553 = vpop.f32.mrf.mxu0
        %v554 = vadd.f32 0.0, %v553
        %v555 = vpop.f32.mrf.mxu0
        %v556 = vadd.f32 0.0, %v555
        %v557 = vpop.f32.mrf.mxu0
        %v558 = vadd.f32 0.0, %v557
        %v559 = vpop.f32.mrf.mxu0
        %v560 = vadd.f32 0.0, %v559
        %561 = vmatprep.mubr.bf16.mxu0 0
        %562 = vmatmul.mubr.bf16.gmra.mxu0 %v449
        %v563 = vpop.f32.mrf.mxu0
        %v564 = vadd.f32 0.0, %v563
        %v565 = vpop.f32.mrf.mxu0
        %v566 = vadd.f32 0.0, %v565
        %v567 = vpop.f32.mrf.mxu0
        %v568 = vadd.f32 0.0, %v567
        %v569 = vpop.f32.mrf.mxu0
        %v570 = vadd.f32 0.0, %v569
        %571 = vmatprep.mubr.bf16.mxu0 0
        %572 = vmatmul.mubr.bf16.gmra.mxu0 %v452
        %v573 = vpop.f32.mrf.mxu0
        %v574 = vadd.f32 0.0, %v573
        %v575 = vpop.f32.mrf.mxu0
        %v576 = vadd.f32 0.0, %v575
        %v577 = vpop.f32.mrf.mxu0
        %v578 = vadd.f32 0.0, %v577
        %v579 = vpop.f32.mrf.mxu0
        %v580 = vadd.f32 0.0, %v579
        %581 = vmatprep.mubr.bf16.mxu0 0
        %582 = vmatmul.mubr.bf16.gmra.mxu0 %v455
        %v583 = vpop.f32.mrf.mxu0
        %v584 = vadd.f32 0.0, %v583
        %v585 = vpop.f32.mrf.mxu0
        %v586 = vadd.f32 0.0, %v585
        %v587 = vpop.f32.mrf.mxu0
        %v588 = vadd.f32 0.0, %v587
        %v589 = vpop.f32.mrf.mxu0
        %v590 = vadd.f32 0.0, %v589
        %591 = vmatprep.mubr.bf16.mxu0 0
        %592 = vmatmul.mubr.bf16.gmra.mxu0 %v458
        %v593 = vpop.f32.mrf.mxu0
        %v594 = vadd.f32 0.0, %v593
        %v595 = vpop.f32.mrf.mxu0
        %v596 = vadd.f32 0.0, %v595
        %v597 = vpop.f32.mrf.mxu0
        %v598 = vadd.f32 0.0, %v597
        %v599 = vpop.f32.mrf.mxu0
        %v600 = vadd.f32 0.0, %v599
        %601 = vmatprep.mubr.bf16.mxu0 0
        %602 = vmatmul.mubr.bf16.gmra.mxu0 %v461
        %v603 = vpop.f32.mrf.mxu0
        %v604 = vadd.f32 0.0, %v603
        %v605 = vpop.f32.mrf.mxu0
        %v606 = vadd.f32 0.0, %v605
        %v607 = vpop.f32.mrf.mxu0
        %v608 = vadd.f32 0.0, %v607
        %v609 = vpop.f32.mrf.mxu0
        %v610 = vadd.f32 0.0, %v609
        %611 = vmatprep.mubr.bf16.mxu0 0
        %612 = vmatmul.mubr.bf16.gmra.mxu0 %v464
        %v613 = vpop.f32.mrf.mxu0
        %v614 = vadd.f32 0.0, %v613
        %v615 = vpop.f32.mrf.mxu0
        %v616 = vadd.f32 0.0, %v615
        %v617 = vpop.f32.mrf.mxu0
        %v618 = vadd.f32 0.0, %v617
        %v619 = vpop.f32.mrf.mxu0
        %v620 = vadd.f32 0.0, %v619
        %621 = vmatprep.mubr.bf16.mxu0 0
        %622 = vmatmul.mubr.bf16.gmra.mxu0 %v467
        %v623 = vpop.f32.mrf.mxu0
        %v624 = vadd.f32 0.0, %v623
        %v625 = vpop.f32.mrf.mxu0
        %v626 = vadd.f32 0.0, %v625
        %v627 = vpop.f32.mrf.mxu0
        %v628 = vadd.f32 0.0, %v627
        %v629 = vpop.f32.mrf.mxu0
        %v630 = vadd.f32 0.0, %v629
        %631 = vdwg.mxu0
        %632 = vmatprep.subr.bf16.mxu0 0
        %633 = vmatpush1.bf16.msra.mxu0 0
        %634 = vmatprep.subr.bf16.mxu0 0
        %635 = vmatpush1.bf16.msra.mxu0 0
        %636 = vmatprep.subr.bf16.mxu0 0
        %637 = vmatpush1.bf16.msra.mxu0 0
        %638 = vmatprep.subr.bf16.mxu0 0
        %639 = vmatpush1.bf16.msra.mxu0 0
        %640 = vmatprep.subr.bf16.mxu0 0
        %641 = vmatpush1.bf16.msra.mxu0 0
        %642 = vmatprep.subr.bf16.mxu0 0
        %643 = vmatpush1.bf16.msra.mxu0 0
        %644 = vmatprep.subr.bf16.mxu0 0
        %645 = vmatpush1.bf16.msra.mxu0 0
        %646 = vmatprep.subr.bf16.mxu0 0
        %647 = vmatpush1.bf16.msra.mxu0 %v477
        %648 = vmatprep.subr.bf16.mxu0 0
        %649 = vmatpush2.bf16.msra.mxu0 0
        %650 = vmatprep.subr.bf16.mxu0 0
        %651 = vmatpush2.bf16.msra.mxu0 0
        %652 = vmatprep.subr.bf16.mxu0 0
        %653 = vmatpush2.bf16.msra.mxu0 0
        %654 = vmatprep.subr.bf16.mxu0 0
        %655 = vmatpush2.bf16.msra.mxu0 0
        %656 = vmatprep.subr.bf16.mxu0 0
        %657 = vmatpush2.bf16.msra.mxu0 0
        %658 = vmatprep.subr.bf16.mxu0 0
        %659 = vmatpush2.bf16.msra.mxu0 0
        %660 = vmatprep.subr.bf16.mxu0 0
        %661 = vmatpush2.bf16.msra.mxu0 0
        %662 = vmatprep.subr.bf16.mxu0 0
        %663 = vmatpush2.bf16.msra.mxu0 0
        %664 = vmatprep.mubr.bf16.mxu0 0
        %665 = vmatmul.mubr.bf16.gmra.mxu0 %v434
        %v666 = vpop.f32.mrf.mxu0
        %v667 = vadd.f32 0.0, %v666
        %v668 = vpop.f32.mrf.mxu0
        %v669 = vpop.f32.mrf.mxu0
        %v670 = vadd.f32 0.0, %v669
        %v671 = vpop.f32.mrf.mxu0
        %672 = vmatprep.mubr.bf16.mxu0 0
        %673 = vmatmul.mubr.bf16.gmra.mxu0 %v437
        %v674 = vpop.f32.mrf.mxu0
        %v675 = vadd.f32 0.0, %v674
        %v676 = vpop.f32.mrf.mxu0
        %v677 = vpop.f32.mrf.mxu0
        %v678 = vadd.f32 0.0, %v677
        %v679 = vpop.f32.mrf.mxu0
        %680 = vmatprep.mubr.bf16.mxu0 0
        %681 = vmatmul.mubr.bf16.gmra.mxu0 %v440
        %v682 = vpop.f32.mrf.mxu0
        %v683 = vadd.f32 0.0, %v682
        %v684 = vpop.f32.mrf.mxu0
        %v685 = vpop.f32.mrf.mxu0
        %v686 = vadd.f32 0.0, %v685
        %v687 = vpop.f32.mrf.mxu0
        %688 = vmatprep.mubr.bf16.mxu0 0
        %689 = vmatmul.mubr.bf16.gmra.mxu0 %v443
        %v690 = vpop.f32.mrf.mxu0
        %v691 = vadd.f32 0.0, %v690
        %v692 = vpop.f32.mrf.mxu0
        %v693 = vpop.f32.mrf.mxu0
        %v694 = vadd.f32 0.0, %v693
        %v695 = vpop.f32.mrf.mxu0
        %696 = vmatprep.mubr.bf16.mxu0 0
        %697 = vmatmul.mubr.bf16.gmra.mxu0 %v446
        %v698 = vpop.f32.mrf.mxu0
        %v699 = vadd.f32 0.0, %v698
        %v700 = vpop.f32.mrf.mxu0
        %v701 = vpop.f32.mrf.mxu0
        %v702 = vadd.f32 0.0, %v701
        %v703 = vpop.f32.mrf.mxu0
        %704 = vmatprep.mubr.bf16.mxu0 0
        %705 = vmatmul.mubr.bf16.gmra.mxu0 %v449
        %v706 = vpop.f32.mrf.mxu0
        %v707 = vadd.f32 0.0, %v706
        %v708 = vpop.f32.mrf.mxu0
        %v709 = vpop.f32.mrf.mxu0
        %v710 = vadd.f32 0.0, %v709
        %v711 = vpop.f32.mrf.mxu0
        %712 = vmatprep.mubr.bf16.mxu0 0
        %713 = vmatmul.mubr.bf16.gmra.mxu0 %v452
        %v714 = vpop.f32.mrf.mxu0
        %v715 = vadd.f32 0.0, %v714
        %v716 = vpop.f32.mrf.mxu0
        %v717 = vpop.f32.mrf.mxu0
        %v718 = vadd.f32 0.0, %v717
        %v719 = vpop.f32.mrf.mxu0
        %720 = vmatprep.mubr.bf16.mxu0 0
        %721 = vmatmul.mubr.bf16.gmra.mxu0 %v455
        %v722 = vpop.f32.mrf.mxu0
        %v723 = vadd.f32 0.0, %v722
        %v724 = vpop.f32.mrf.mxu0
        %v725 = vpop.f32.mrf.mxu0
        %v726 = vadd.f32 0.0, %v725
        %v727 = vpop.f32.mrf.mxu0
        %728 = vmatprep.mubr.bf16.mxu0 0
        %729 = vmatmul.mubr.bf16.gmra.mxu0 %v458
        %v730 = vpop.f32.mrf.mxu0
        %v731 = vadd.f32 0.0, %v730
        %v732 = vpop.f32.mrf.mxu0
        %v733 = vpop.f32.mrf.mxu0
        %v734 = vadd.f32 0.0, %v733
        %v735 = vpop.f32.mrf.mxu0
        %736 = vmatprep.mubr.bf16.mxu0 0
        %737 = vmatmul.mubr.bf16.gmra.mxu0 %v461
        %v738 = vpop.f32.mrf.mxu0
        %v739 = vadd.f32 0.0, %v738
        %v740 = vpop.f32.mrf.mxu0
        %v741 = vpop.f32.mrf.mxu0
        %v742 = vadd.f32 0.0, %v741
        %v743 = vpop.f32.mrf.mxu0
        %744 = vmatprep.mubr.bf16.mxu0 0
        %745 = vmatmul.mubr.bf16.gmra.mxu0 %v464
        %v746 = vpop.f32.mrf.mxu0
        %v747 = vadd.f32 0.0, %v746
        %v748 = vpop.f32.mrf.mxu0
        %v749 = vpop.f32.mrf.mxu0
        %v750 = vadd.f32 0.0, %v749
        %v751 = vpop.f32.mrf.mxu0
        %752 = vmatprep.mubr.bf16.mxu0 0
        %753 = vmatmul.mubr.bf16.gmra.mxu0 %v467
        %v754 = vpop.f32.mrf.mxu0
        %v755 = vadd.f32 0.0, %v754
        %v756 = vpop.f32.mrf.mxu0
        %v757 = vpop.f32.mrf.mxu0
        %v758 = vadd.f32 0.0, %v757
        %v759 = vpop.f32.mrf.mxu0
        %760 = vdwg.mxu0
        %v764 = vunpack.c.l.b16 %v332
        %v765 = vunpack.c.l.b16 %v333
        %v766 = vunpack.c.l.b16 %v334
        %v767 = vpack.c.b16 %v765, %v764
        %v768 = vpack.c.b16 %v388, %v766
        %v769 = vpack.c.b16 %v390, %v389
        %v770 = vpack.c.b16 %v392, %v391
        %v771 = vpack.c.b16 %v394, %v393
        %v772 = vpack.c.b16 %v396, %v395
        %v773 = vpack.c.b16 %v398, %v397
        %v774 = vpack.c.b16 %v400, %v399
        %v775 = vpack.c.b16 %v402, %v401
        %v776 = vpack.c.b16 %v404, %v403
        %v777 = vpack.c.b16 %v406, %v405
        %v778 = vpack.c.b16 %v408, %v407
        %v781 = vunpack.c.l.b16 %v356
        %v782 = vunpack.c.h.b16 %v356
        %v783 = vunpack.c.l.b16 %v357
        %v784 = vpack.c.b16 %v781, %v781
        %v785 = vpack.c.b16 %v782, %v782
        %v786 = vpack.c.b16 %v783, %v783
        %v788 = vsel %vm432, %v767, 0
        %v791 = vsel %vm432, %v768, 0
        %v794 = vsel %vm432, %v769, 0
        %v797 = vsel %vm432, %v770, 0
        %v800 = vsel %vm432, %v771, 0
        %v803 = vsel %vm432, %v772, 0
        %v806 = vsel %vm432, %v773, 0
        %v809 = vsel %vm432, %v774, 0
        %v812 = vsel %vm432, %v775, 0
        %v815 = vsel %vm432, %v776, 0
        %v818 = vsel %vm432, %v777, 0
        %v821 = vsel %vm432, %v778, 0
        %v824 = vsel %vm469, %v784, 0
        %v827 = vsel %vm469, %v785, 0
        %v830 = vsel %vm469, %v786, 0
        %832 = vmatprep.subr.bf16.mxu0 0
        %833 = vmatpush1.bf16.msra.mxu0 0
        %834 = vmatprep.subr.bf16.mxu0 0
        %835 = vmatpush1.bf16.msra.mxu0 0
        %836 = vmatprep.subr.bf16.mxu0 0
        %837 = vmatpush1.bf16.msra.mxu0 0
        %838 = vmatprep.subr.bf16.mxu0 0
        %839 = vmatpush1.bf16.msra.mxu0 0
        %840 = vmatprep.subr.bf16.mxu0 0
        %841 = vmatpush1.bf16.msra.mxu0 0
        %842 = vmatprep.subr.bf16.mxu0 0
        %843 = vmatpush1.bf16.msra.mxu0 0
        %844 = vmatprep.subr.bf16.mxu0 0
        %845 = vmatpush1.bf16.msra.mxu0 0
        %846 = vmatprep.subr.bf16.mxu0 %v827
        %847 = vmatpush1.bf16.msra.mxu0 %v824
        %848 = vmatprep.subr.bf16.mxu0 0
        %849 = vmatpush2.bf16.msra.mxu0 0
        %850 = vmatprep.subr.bf16.mxu0 0
        %851 = vmatpush2.bf16.msra.mxu0 0
        %852 = vmatprep.subr.bf16.mxu0 0
        %853 = vmatpush2.bf16.msra.mxu0 0
        %854 = vmatprep.subr.bf16.mxu0 0
        %855 = vmatpush2.bf16.msra.mxu0 0
        %856 = vmatprep.subr.bf16.mxu0 0
        %857 = vmatpush2.bf16.msra.mxu0 0
        %858 = vmatprep.subr.bf16.mxu0 0
        %859 = vmatpush2.bf16.msra.mxu0 0
        %860 = vmatprep.subr.bf16.mxu0 0
        %861 = vmatpush2.bf16.msra.mxu0 0
        %862 = vmatprep.subr.bf16.mxu0 0
        %863 = vmatpush2.bf16.msra.mxu0 0
        %864 = vmatprep.mubr.bf16.mxu0 0
        %865 = vmatmul.mubr.bf16.gmra.mxu0 %v788
        %v866 = vpop.f32.mrf.mxu0
        %v867 = vadd.f32 %v514, %v866
        %v868 = vpop.f32.mrf.mxu0
        %v869 = vadd.f32 %v516, %v868
        %v870 = vpop.f32.mrf.mxu0
        %v871 = vadd.f32 %v518, %v870
        %v872 = vpop.f32.mrf.mxu0
        %v873 = vadd.f32 %v520, %v872
        %874 = vmatprep.mubr.bf16.mxu0 0
        %875 = vmatmul.mubr.bf16.gmra.mxu0 %v791
        %v876 = vpop.f32.mrf.mxu0
        %v877 = vadd.f32 %v524, %v876
        %v878 = vpop.f32.mrf.mxu0
        %v879 = vadd.f32 %v526, %v878
        %v880 = vpop.f32.mrf.mxu0
        %v881 = vadd.f32 %v528, %v880
        %v882 = vpop.f32.mrf.mxu0
        %v883 = vadd.f32 %v530, %v882
        %884 = vmatprep.mubr.bf16.mxu0 0
        %885 = vmatmul.mubr.bf16.gmra.mxu0 %v794
        %v886 = vpop.f32.mrf.mxu0
        %v887 = vadd.f32 %v534, %v886
        %v888 = vpop.f32.mrf.mxu0
        %v889 = vadd.f32 %v536, %v888
        %v890 = vpop.f32.mrf.mxu0
        %v891 = vadd.f32 %v538, %v890
        %v892 = vpop.f32.mrf.mxu0
        %v893 = vadd.f32 %v540, %v892
        %894 = vmatprep.mubr.bf16.mxu0 0
        %895 = vmatmul.mubr.bf16.gmra.mxu0 %v797
        %v896 = vpop.f32.mrf.mxu0
        %v897 = vadd.f32 %v544, %v896
        %v898 = vpop.f32.mrf.mxu0
        %v899 = vadd.f32 %v546, %v898
        %v900 = vpop.f32.mrf.mxu0
        %v901 = vadd.f32 %v548, %v900
        %v902 = vpop.f32.mrf.mxu0
        %v903 = vadd.f32 %v550, %v902
        %904 = vmatprep.mubr.bf16.mxu0 0
        %905 = vmatmul.mubr.bf16.gmra.mxu0 %v800
        %v906 = vpop.f32.mrf.mxu0
        %v907 = vadd.f32 %v554, %v906
        %v908 = vpop.f32.mrf.mxu0
        %v909 = vadd.f32 %v556, %v908
        %v910 = vpop.f32.mrf.mxu0
        %v911 = vadd.f32 %v558, %v910
        %v912 = vpop.f32.mrf.mxu0
        %v913 = vadd.f32 %v560, %v912
        %914 = vmatprep.mubr.bf16.mxu0 0
        %915 = vmatmul.mubr.bf16.gmra.mxu0 %v803
        %v916 = vpop.f32.mrf.mxu0
        %v917 = vadd.f32 %v564, %v916
        %v918 = vpop.f32.mrf.mxu0
        %v919 = vadd.f32 %v566, %v918
        %v920 = vpop.f32.mrf.mxu0
        %v921 = vadd.f32 %v568, %v920
        %v922 = vpop.f32.mrf.mxu0
        %v923 = vadd.f32 %v570, %v922
        %924 = vmatprep.mubr.bf16.mxu0 0
        %925 = vmatmul.mubr.bf16.gmra.mxu0 %v806
        %v926 = vpop.f32.mrf.mxu0
        %v927 = vadd.f32 %v574, %v926
        %v928 = vpop.f32.mrf.mxu0
        %v929 = vadd.f32 %v576, %v928
        %v930 = vpop.f32.mrf.mxu0
        %v931 = vadd.f32 %v578, %v930
        %v932 = vpop.f32.mrf.mxu0
        %v933 = vadd.f32 %v580, %v932
        %934 = vmatprep.mubr.bf16.mxu0 0
        %935 = vmatmul.mubr.bf16.gmra.mxu0 %v809
        %v936 = vpop.f32.mrf.mxu0
        %v937 = vadd.f32 %v584, %v936
        %v938 = vpop.f32.mrf.mxu0
        %v939 = vadd.f32 %v586, %v938
        %v940 = vpop.f32.mrf.mxu0
        %v941 = vadd.f32 %v588, %v940
        %v942 = vpop.f32.mrf.mxu0
        %v943 = vadd.f32 %v590, %v942
        %944 = vmatprep.mubr.bf16.mxu0 0
        %945 = vmatmul.mubr.bf16.gmra.mxu0 %v812
        %v946 = vpop.f32.mrf.mxu0
        %v947 = vadd.f32 %v594, %v946
        %v948 = vpop.f32.mrf.mxu0
        %v949 = vadd.f32 %v596, %v948
        %v950 = vpop.f32.mrf.mxu0
        %v951 = vadd.f32 %v598, %v950
        %v952 = vpop.f32.mrf.mxu0
        %v953 = vadd.f32 %v600, %v952
        %954 = vmatprep.mubr.bf16.mxu0 0
        %955 = vmatmul.mubr.bf16.gmra.mxu0 %v815
        %v956 = vpop.f32.mrf.mxu0
        %v957 = vadd.f32 %v604, %v956
        %v958 = vpop.f32.mrf.mxu0
        %v959 = vadd.f32 %v606, %v958
        %v960 = vpop.f32.mrf.mxu0
        %v961 = vadd.f32 %v608, %v960
        %v962 = vpop.f32.mrf.mxu0
        %v963 = vadd.f32 %v610, %v962
        %964 = vmatprep.mubr.bf16.mxu0 0
        %965 = vmatmul.mubr.bf16.gmra.mxu0 %v818
        %v966 = vpop.f32.mrf.mxu0
        %v967 = vadd.f32 %v614, %v966
        %v968 = vpop.f32.mrf.mxu0
        %v969 = vadd.f32 %v616, %v968
        %v970 = vpop.f32.mrf.mxu0
        %v971 = vadd.f32 %v618, %v970
        %v972 = vpop.f32.mrf.mxu0
        %v973 = vadd.f32 %v620, %v972
        %974 = vmatprep.mubr.bf16.mxu0 0
        %975 = vmatmul.mubr.bf16.gmra.mxu0 %v821
        %v976 = vpop.f32.mrf.mxu0
        %v977 = vadd.f32 %v624, %v976
        %v978 = vpop.f32.mrf.mxu0
        %v979 = vadd.f32 %v626, %v978
        %v980 = vpop.f32.mrf.mxu0
        %v981 = vadd.f32 %v628, %v980
        %v982 = vpop.f32.mrf.mxu0
        %v983 = vadd.f32 %v630, %v982
        %984 = vdwg.mxu0
        %985 = vmatprep.subr.bf16.mxu0 0
        %986 = vmatpush1.bf16.msra.mxu0 0
        %987 = vmatprep.subr.bf16.mxu0 0
        %988 = vmatpush1.bf16.msra.mxu0 0
        %989 = vmatprep.subr.bf16.mxu0 0
        %990 = vmatpush1.bf16.msra.mxu0 0
        %991 = vmatprep.subr.bf16.mxu0 0
        %992 = vmatpush1.bf16.msra.mxu0 0
        %993 = vmatprep.subr.bf16.mxu0 0
        %994 = vmatpush1.bf16.msra.mxu0 0
        %995 = vmatprep.subr.bf16.mxu0 0
        %996 = vmatpush1.bf16.msra.mxu0 0
        %997 = vmatprep.subr.bf16.mxu0 0
        %998 = vmatpush1.bf16.msra.mxu0 0
        %999 = vmatprep.subr.bf16.mxu0 0
        %1000 = vmatpush1.bf16.msra.mxu0 %v830
        %1001 = vmatprep.subr.bf16.mxu0 0
        %1002 = vmatpush2.bf16.msra.mxu0 0
        %1003 = vmatprep.subr.bf16.mxu0 0
        %1004 = vmatpush2.bf16.msra.mxu0 0
        %1005 = vmatprep.subr.bf16.mxu0 0
        %1006 = vmatpush2.bf16.msra.mxu0 0
        %1007 = vmatprep.subr.bf16.mxu0 0
        %1008 = vmatpush2.bf16.msra.mxu0 0
        %1009 = vmatprep.subr.bf16.mxu0 0
        %1010 = vmatpush2.bf16.msra.mxu0 0
        %1011 = vmatprep.subr.bf16.mxu0 0
        %1012 = vmatpush2.bf16.msra.mxu0 0
        %1013 = vmatprep.subr.bf16.mxu0 0
        %1014 = vmatpush2.bf16.msra.mxu0 0
        %1015 = vmatprep.subr.bf16.mxu0 0
        %1016 = vmatpush2.bf16.msra.mxu0 0
        %1017 = vmatprep.mubr.bf16.mxu0 0
        %1018 = vmatmul.mubr.bf16.gmra.mxu0 %v788
        %v1019 = vpop.f32.mrf.mxu0
        %v1020 = vadd.f32 %v667, %v1019
        %v1021 = vpop.f32.mrf.mxu0
        %v1022 = vpop.f32.mrf.mxu0
        %v1023 = vadd.f32 %v670, %v1022
        %v1024 = vpop.f32.mrf.mxu0
        %1025 = vmatprep.mubr.bf16.mxu0 0
        %1026 = vmatmul.mubr.bf16.gmra.mxu0 %v791
        %v1027 = vpop.f32.mrf.mxu0
        %v1028 = vadd.f32 %v675, %v1027
        %v1029 = vpop.f32.mrf.mxu0
        %v1030 = vpop.f32.mrf.mxu0
        %v1031 = vadd.f32 %v678, %v1030
        %v1032 = vpop.f32.mrf.mxu0
        %1033 = vmatprep.mubr.bf16.mxu0 0
        %1034 = vmatmul.mubr.bf16.gmra.mxu0 %v794
        %v1035 = vpop.f32.mrf.mxu0
        %v1036 = vadd.f32 %v683, %v1035
        %v1037 = vpop.f32.mrf.mxu0
        %v1038 = vpop.f32.mrf.mxu0
        %v1039 = vadd.f32 %v686, %v1038
        %v1040 = vpop.f32.mrf.mxu0
        %1041 = vmatprep.mubr.bf16.mxu0 0
        %1042 = vmatmul.mubr.bf16.gmra.mxu0 %v797
        %v1043 = vpop.f32.mrf.mxu0
        %v1044 = vadd.f32 %v691, %v1043
        %v1045 = vpop.f32.mrf.mxu0
        %v1046 = vpop.f32.mrf.mxu0
        %v1047 = vadd.f32 %v694, %v1046
        %v1048 = vpop.f32.mrf.mxu0
        %1049 = vmatprep.mubr.bf16.mxu0 0
        %1050 = vmatmul.mubr.bf16.gmra.mxu0 %v800
        %v1051 = vpop.f32.mrf.mxu0
        %v1052 = vadd.f32 %v699, %v1051
        %v1053 = vpop.f32.mrf.mxu0
        %v1054 = vpop.f32.mrf.mxu0
        %v1055 = vadd.f32 %v702, %v1054
        %v1056 = vpop.f32.mrf.mxu0
        %1057 = vmatprep.mubr.bf16.mxu0 0
        %1058 = vmatmul.mubr.bf16.gmra.mxu0 %v803
        %v1059 = vpop.f32.mrf.mxu0
        %v1060 = vadd.f32 %v707, %v1059
        %v1061 = vpop.f32.mrf.mxu0
        %v1062 = vpop.f32.mrf.mxu0
        %v1063 = vadd.f32 %v710, %v1062
        %v1064 = vpop.f32.mrf.mxu0
        %1065 = vmatprep.mubr.bf16.mxu0 0
        %1066 = vmatmul.mubr.bf16.gmra.mxu0 %v806
        %v1067 = vpop.f32.mrf.mxu0
        %v1068 = vadd.f32 %v715, %v1067
        %v1069 = vpop.f32.mrf.mxu0
        %v1070 = vpop.f32.mrf.mxu0
        %v1071 = vadd.f32 %v718, %v1070
        %v1072 = vpop.f32.mrf.mxu0
        %1073 = vmatprep.mubr.bf16.mxu0 0
        %1074 = vmatmul.mubr.bf16.gmra.mxu0 %v809
        %v1075 = vpop.f32.mrf.mxu0
        %v1076 = vadd.f32 %v723, %v1075
        %v1077 = vpop.f32.mrf.mxu0
        %v1078 = vpop.f32.mrf.mxu0
        %v1079 = vadd.f32 %v726, %v1078
        %v1080 = vpop.f32.mrf.mxu0
        %1081 = vmatprep.mubr.bf16.mxu0 0
        %1082 = vmatmul.mubr.bf16.gmra.mxu0 %v812
        %v1083 = vpop.f32.mrf.mxu0
        %v1084 = vadd.f32 %v731, %v1083
        %v1085 = vpop.f32.mrf.mxu0
        %v1086 = vpop.f32.mrf.mxu0
        %v1087 = vadd.f32 %v734, %v1086
        %v1088 = vpop.f32.mrf.mxu0
        %1089 = vmatprep.mubr.bf16.mxu0 0
        %1090 = vmatmul.mubr.bf16.gmra.mxu0 %v815
        %v1091 = vpop.f32.mrf.mxu0
        %v1092 = vadd.f32 %v739, %v1091
        %v1093 = vpop.f32.mrf.mxu0
        %v1094 = vpop.f32.mrf.mxu0
        %v1095 = vadd.f32 %v742, %v1094
        %v1096 = vpop.f32.mrf.mxu0
        %1097 = vmatprep.mubr.bf16.mxu0 0
        %1098 = vmatmul.mubr.bf16.gmra.mxu0 %v818
        %v1099 = vpop.f32.mrf.mxu0
        %v1100 = vadd.f32 %v747, %v1099
        %v1101 = vpop.f32.mrf.mxu0
        %v1102 = vpop.f32.mrf.mxu0
        %v1103 = vadd.f32 %v750, %v1102
        %v1104 = vpop.f32.mrf.mxu0
        %1105 = vmatprep.mubr.bf16.mxu0 0
        %1106 = vmatmul.mubr.bf16.gmra.mxu0 %v821
        %v1107 = vpop.f32.mrf.mxu0
        %v1108 = vadd.f32 %v755, %v1107
        %v1109 = vpop.f32.mrf.mxu0
        %v1110 = vpop.f32.mrf.mxu0
        %v1111 = vadd.f32 %v758, %v1110
        %v1112 = vpop.f32.mrf.mxu0
        %1113 = vdwg.mxu0
        %v1114 = vld [vmem:[#allocation2 + $0x18] sm:$0xf]
        %v1115 = vld [vmem:[#allocation2 + $0x1c] sm:$0xf]
        %v1116 = vld [vmem:[#allocation2 + $0x20] sm:$0xf]
        %v1117 = vld [vmem:[#allocation2 + $0x24] sm:$0xf]
        %v1118 = vld [vmem:[#allocation2 + $0x28] sm:$0xf]
        %v1119 = vld [vmem:[#allocation2 + $0x2c] sm:$0xf]
        %v1120 = vld [vmem:[#allocation2 + $0x30] sm:$0xf]
        %v1121 = vld [vmem:[#allocation2 + $0x34] sm:$0xf]
        %v1122 = vld [vmem:[#allocation2 + $0x38] sm:$0xf]
        %v1123 = vld [vmem:[#allocation2 + $0x3c] sm:$0xf]
        %v1124 = vld [vmem:[#allocation2 + $0x40] sm:$0xf]
        %v1125 = vld [vmem:[#allocation2 + $0x44] sm:$0xf]
        %v1126 = vld [vmem:[#allocation2 + $0x48] sm:$0xf]
        %v1127 = vld [vmem:[#allocation2 + $0x4c] sm:$0xf]
        %v1128 = vld [vmem:[#allocation2 + $0x50] sm:$0xf]
        %v1129 = vld [vmem:[#allocation2 + $0x54] sm:$0xf]
        %v1130 = vld [vmem:[#allocation2 + $0x58] sm:$0xf]
        %v1131 = vld [vmem:[#allocation2 + $0x5c] sm:$0xf]
        %v1132 = vld [vmem:[#allocation2 + $0x60] sm:$0xf]
        %v1133 = vld [vmem:[#allocation2 + $0x64] sm:$0xf]
        %v1134 = vld [vmem:[#allocation2 + $0x68] sm:$0xf]
        %v1135 = vld [vmem:[#allocation2 + $0x6c] sm:$0xf]
        %v1136 = vld [vmem:[#allocation2 + $0x70] sm:$0xf]
        %v1137 = vld [vmem:[#allocation2 + $0x74] sm:$0xf]
        %s1138 = scalar_lea.vmem %s2, 24
        %v1139 = vld [vmem:[%s1138] sm:$0xff]
        %v1140 = vld [vmem:[%s1138 + $0x8] sm:$0xf]
        %v1165 = vunpack.c.l.b16 %v1114
        %v1166 = vunpack.c.l.b16 %v1115
        %v1167 = vunpack.c.l.b16 %v1116
        %v1168 = vunpack.c.l.b16 %v1117
        %v1169 = vunpack.c.l.b16 %v1118
        %v1170 = vunpack.c.l.b16 %v1119
        %v1171 = vunpack.c.l.b16 %v1120
        %v1172 = vunpack.c.l.b16 %v1121
        %v1173 = vunpack.c.l.b16 %v1122
        %v1174 = vunpack.c.l.b16 %v1123
        %v1175 = vunpack.c.l.b16 %v1124
        %v1176 = vunpack.c.l.b16 %v1125
        %v1177 = vunpack.c.l.b16 %v1126
        %v1178 = vunpack.c.l.b16 %v1127
        %v1179 = vunpack.c.l.b16 %v1128
        %v1180 = vunpack.c.l.b16 %v1129
        %v1181 = vunpack.c.l.b16 %v1130
        %v1182 = vunpack.c.l.b16 %v1131
        %v1183 = vunpack.c.l.b16 %v1132
        %v1184 = vunpack.c.l.b16 %v1133
        %v1185 = vunpack.c.l.b16 %v1134
        %v1186 = vunpack.c.l.b16 %v1135
        %v1187 = vunpack.c.l.b16 %v1136
        %v1188 = vunpack.c.l.b16 %v1137
        %v1189 = vpack.c.b16 %v1166, %v1165
        %v1190 = vpack.c.b16 %v1168, %v1167
        %v1191 = vpack.c.b16 %v1170, %v1169
        %v1192 = vpack.c.b16 %v1172, %v1171
        %v1193 = vpack.c.b16 %v1174, %v1173
        %v1194 = vpack.c.b16 %v1176, %v1175
        %v1195 = vpack.c.b16 %v1178, %v1177
        %v1196 = vpack.c.b16 %v1180, %v1179
        %v1197 = vpack.c.b16 %v1182, %v1181
        %v1198 = vpack.c.b16 %v1184, %v1183
        %v1199 = vpack.c.b16 %v1186, %v1185
        %v1200 = vpack.c.b16 %v1188, %v1187
        %v1203 = vunpack.c.l.b16 %v1139
        %v1204 = vunpack.c.h.b16 %v1139
        %v1205 = vunpack.c.l.b16 %v1140
        %v1206 = vpack.c.b16 %v1203, %v1203
        %v1207 = vpack.c.b16 %v1204, %v1204
        %v1208 = vpack.c.b16 %v1205, %v1205
        %v1210 = vsel %vm432, %v1189, 0
        %v1213 = vsel %vm432, %v1190, 0
        %v1216 = vsel %vm432, %v1191, 0
        %v1219 = vsel %vm432, %v1192, 0
        %v1222 = vsel %vm432, %v1193, 0
        %v1225 = vsel %vm432, %v1194, 0
        %v1228 = vsel %vm432, %v1195, 0
        %v1231 = vsel %vm432, %v1196, 0
        %v1234 = vsel %vm432, %v1197, 0
        %v1237 = vsel %vm432, %v1198, 0
        %v1240 = vsel %vm432, %v1199, 0
        %v1243 = vsel %vm432, %v1200, 0
        %v1246 = vsel %vm469, %v1206, 0
        %v1249 = vsel %vm469, %v1207, 0
        %v1252 = vsel %vm469, %v1208, 0
        %1254 = vmatprep.subr.bf16.mxu0 0
        %1255 = vmatpush1.bf16.msra.mxu0 0
        %1256 = vmatprep.subr.bf16.mxu0 0
        %1257 = vmatpush1.bf16.msra.mxu0 0
        %1258 = vmatprep.subr.bf16.mxu0 0
        %1259 = vmatpush1.bf16.msra.mxu0 0
        %1260 = vmatprep.subr.bf16.mxu0 0
        %1261 = vmatpush1.bf16.msra.mxu0 0
        %1262 = vmatprep.subr.bf16.mxu0 0
        %1263 = vmatpush1.bf16.msra.mxu0 0
        %1264 = vmatprep.subr.bf16.mxu0 0
        %1265 = vmatpush1.bf16.msra.mxu0 0
        %1266 = vmatprep.subr.bf16.mxu0 0
        %1267 = vmatpush1.bf16.msra.mxu0 0
        %1268 = vmatprep.subr.bf16.mxu0 %v1249
        %1269 = vmatpush1.bf16.msra.mxu0 %v1246
        %1270 = vmatprep.subr.bf16.mxu0 0
        %1271 = vmatpush2.bf16.msra.mxu0 0
        %1272 = vmatprep.subr.bf16.mxu0 0
        %1273 = vmatpush2.bf16.msra.mxu0 0
        %1274 = vmatprep.subr.bf16.mxu0 0
        %1275 = vmatpush2.bf16.msra.mxu0 0
        %1276 = vmatprep.subr.bf16.mxu0 0
        %1277 = vmatpush2.bf16.msra.mxu0 0
        %1278 = vmatprep.subr.bf16.mxu0 0
        %1279 = vmatpush2.bf16.msra.mxu0 0
        %1280 = vmatprep.subr.bf16.mxu0 0
        %1281 = vmatpush2.bf16.msra.mxu0 0
        %1282 = vmatprep.subr.bf16.mxu0 0
        %1283 = vmatpush2.bf16.msra.mxu0 0
        %1284 = vmatprep.subr.bf16.mxu0 0
        %1285 = vmatpush2.bf16.msra.mxu0 0
        %1286 = vmatprep.mubr.bf16.mxu0 0
        %1287 = vmatmul.mubr.bf16.gmra.mxu0 %v1210
        %v1288 = vpop.f32.mrf.mxu0
        %v1289 = vadd.f32 0.0, %v1288
        %v1290 = vpop.f32.mrf.mxu0
        %v1291 = vadd.f32 0.0, %v1290
        %v1292 = vpop.f32.mrf.mxu0
        %v1293 = vadd.f32 0.0, %v1292
        %v1294 = vpop.f32.mrf.mxu0
        %v1295 = vadd.f32 0.0, %v1294
        %1296 = vmatprep.mubr.bf16.mxu0 0
        %1297 = vmatmul.mubr.bf16.gmra.mxu0 %v1213
        %v1298 = vpop.f32.mrf.mxu0
        %v1299 = vadd.f32 0.0, %v1298
        %v1300 = vpop.f32.mrf.mxu0
        %v1301 = vadd.f32 0.0, %v1300
        %v1302 = vpop.f32.mrf.mxu0
        %v1303 = vadd.f32 0.0, %v1302
        %v1304 = vpop.f32.mrf.mxu0
        %v1305 = vadd.f32 0.0, %v1304
        %1306 = vmatprep.mubr.bf16.mxu0 0
        %1307 = vmatmul.mubr.bf16.gmra.mxu0 %v1216
        %v1308 = vpop.f32.mrf.mxu0
        %v1309 = vadd.f32 0.0, %v1308
        %v1310 = vpop.f32.mrf.mxu0
        %v1311 = vadd.f32 0.0, %v1310
        %v1312 = vpop.f32.mrf.mxu0
        %v1313 = vadd.f32 0.0, %v1312
        %v1314 = vpop.f32.mrf.mxu0
        %v1315 = vadd.f32 0.0, %v1314
        %1316 = vmatprep.mubr.bf16.mxu0 0
        %1317 = vmatmul.mubr.bf16.gmra.mxu0 %v1219
        %v1318 = vpop.f32.mrf.mxu0
        %v1319 = vadd.f32 0.0, %v1318
        %v1320 = vpop.f32.mrf.mxu0
        %v1321 = vadd.f32 0.0, %v1320
        %v1322 = vpop.f32.mrf.mxu0
        %v1323 = vadd.f32 0.0, %v1322
        %v1324 = vpop.f32.mrf.mxu0
        %v1325 = vadd.f32 0.0, %v1324
        %1326 = vmatprep.mubr.bf16.mxu0 0
        %1327 = vmatmul.mubr.bf16.gmra.mxu0 %v1222
        %v1328 = vpop.f32.mrf.mxu0
        %v1329 = vadd.f32 0.0, %v1328
        %v1330 = vpop.f32.mrf.mxu0
        %v1331 = vadd.f32 0.0, %v1330
        %v1332 = vpop.f32.mrf.mxu0
        %v1333 = vadd.f32 0.0, %v1332
        %v1334 = vpop.f32.mrf.mxu0
        %v1335 = vadd.f32 0.0, %v1334
        %1336 = vmatprep.mubr.bf16.mxu0 0
        %1337 = vmatmul.mubr.bf16.gmra.mxu0 %v1225
        %v1338 = vpop.f32.mrf.mxu0
        %v1339 = vadd.f32 0.0, %v1338
        %v1340 = vpop.f32.mrf.mxu0
        %v1341 = vadd.f32 0.0, %v1340
        %v1342 = vpop.f32.mrf.mxu0
        %v1343 = vadd.f32 0.0, %v1342
        %v1344 = vpop.f32.mrf.mxu0
        %v1345 = vadd.f32 0.0, %v1344
        %1346 = vmatprep.mubr.bf16.mxu0 0
        %1347 = vmatmul.mubr.bf16.gmra.mxu0 %v1228
        %v1348 = vpop.f32.mrf.mxu0
        %v1349 = vadd.f32 0.0, %v1348
        %v1350 = vpop.f32.mrf.mxu0
        %v1351 = vadd.f32 0.0, %v1350
        %v1352 = vpop.f32.mrf.mxu0
        %v1353 = vadd.f32 0.0, %v1352
        %v1354 = vpop.f32.mrf.mxu0
        %v1355 = vadd.f32 0.0, %v1354
        %1356 = vmatprep.mubr.bf16.mxu0 0
        %1357 = vmatmul.mubr.bf16.gmra.mxu0 %v1231
        %v1358 = vpop.f32.mrf.mxu0
        %v1359 = vadd.f32 0.0, %v1358
        %v1360 = vpop.f32.mrf.mxu0
        %v1361 = vadd.f32 0.0, %v1360
        %v1362 = vpop.f32.mrf.mxu0
        %v1363 = vadd.f32 0.0, %v1362
        %v1364 = vpop.f32.mrf.mxu0
        %v1365 = vadd.f32 0.0, %v1364
        %1366 = vmatprep.mubr.bf16.mxu0 0
        %1367 = vmatmul.mubr.bf16.gmra.mxu0 %v1234
        %v1368 = vpop.f32.mrf.mxu0
        %v1369 = vadd.f32 0.0, %v1368
        %v1370 = vpop.f32.mrf.mxu0
        %v1371 = vadd.f32 0.0, %v1370
        %v1372 = vpop.f32.mrf.mxu0
        %v1373 = vadd.f32 0.0, %v1372
        %v1374 = vpop.f32.mrf.mxu0
        %v1375 = vadd.f32 0.0, %v1374
        %1376 = vmatprep.mubr.bf16.mxu0 0
        %1377 = vmatmul.mubr.bf16.gmra.mxu0 %v1237
        %v1378 = vpop.f32.mrf.mxu0
        %v1379 = vadd.f32 0.0, %v1378
        %v1380 = vpop.f32.mrf.mxu0
        %v1381 = vadd.f32 0.0, %v1380
        %v1382 = vpop.f32.mrf.mxu0
        %v1383 = vadd.f32 0.0, %v1382
        %v1384 = vpop.f32.mrf.mxu0
        %v1385 = vadd.f32 0.0, %v1384
        %1386 = vmatprep.mubr.bf16.mxu0 0
        %1387 = vmatmul.mubr.bf16.gmra.mxu0 %v1240
        %v1388 = vpop.f32.mrf.mxu0
        %v1389 = vadd.f32 0.0, %v1388
        %v1390 = vpop.f32.mrf.mxu0
        %v1391 = vadd.f32 0.0, %v1390
        %v1392 = vpop.f32.mrf.mxu0
        %v1393 = vadd.f32 0.0, %v1392
        %v1394 = vpop.f32.mrf.mxu0
        %v1395 = vadd.f32 0.0, %v1394
        %1396 = vmatprep.mubr.bf16.mxu0 0
        %1397 = vmatmul.mubr.bf16.gmra.mxu0 %v1243
        %v1398 = vpop.f32.mrf.mxu0
        %v1399 = vadd.f32 0.0, %v1398
        %v1400 = vpop.f32.mrf.mxu0
        %v1401 = vadd.f32 0.0, %v1400
        %v1402 = vpop.f32.mrf.mxu0
        %v1403 = vadd.f32 0.0, %v1402
        %v1404 = vpop.f32.mrf.mxu0
        %v1405 = vadd.f32 0.0, %v1404
        %1406 = vdwg.mxu0
        %1407 = vmatprep.subr.bf16.mxu0 0
        %1408 = vmatpush1.bf16.msra.mxu0 0
        %1409 = vmatprep.subr.bf16.mxu0 0
        %1410 = vmatpush1.bf16.msra.mxu0 0
        %1411 = vmatprep.subr.bf16.mxu0 0
        %1412 = vmatpush1.bf16.msra.mxu0 0
        %1413 = vmatprep.subr.bf16.mxu0 0
        %1414 = vmatpush1.bf16.msra.mxu0 0
        %1415 = vmatprep.subr.bf16.mxu0 0
        %1416 = vmatpush1.bf16.msra.mxu0 0
        %1417 = vmatprep.subr.bf16.mxu0 0
        %1418 = vmatpush1.bf16.msra.mxu0 0
        %1419 = vmatprep.subr.bf16.mxu0 0
        %1420 = vmatpush1.bf16.msra.mxu0 0
        %1421 = vmatprep.subr.bf16.mxu0 0
        %1422 = vmatpush1.bf16.msra.mxu0 %v1252
        %1423 = vmatprep.subr.bf16.mxu0 0
        %1424 = vmatpush2.bf16.msra.mxu0 0
        %1425 = vmatprep.subr.bf16.mxu0 0
        %1426 = vmatpush2.bf16.msra.mxu0 0
        %1427 = vmatprep.subr.bf16.mxu0 0
        %1428 = vmatpush2.bf16.msra.mxu0 0
        %1429 = vmatprep.subr.bf16.mxu0 0
        %1430 = vmatpush2.bf16.msra.mxu0 0
        %1431 = vmatprep.subr.bf16.mxu0 0
        %1432 = vmatpush2.bf16.msra.mxu0 0
        %1433 = vmatprep.subr.bf16.mxu0 0
        %1434 = vmatpush2.bf16.msra.mxu0 0
        %1435 = vmatprep.subr.bf16.mxu0 0
        %1436 = vmatpush2.bf16.msra.mxu0 0
        %1437 = vmatprep.subr.bf16.mxu0 0
        %1438 = vmatpush2.bf16.msra.mxu0 0
        %1439 = vmatprep.mubr.bf16.mxu0 0
        %1440 = vmatmul.mubr.bf16.gmra.mxu0 %v1210
        %v1441 = vpop.f32.mrf.mxu0
        %v1442 = vadd.f32 0.0, %v1441
        %v1443 = vpop.f32.mrf.mxu0
        %v1444 = vpop.f32.mrf.mxu0
        %v1445 = vadd.f32 0.0, %v1444
        %v1446 = vpop.f32.mrf.mxu0
        %1447 = vmatprep.mubr.bf16.mxu0 0
        %1448 = vmatmul.mubr.bf16.gmra.mxu0 %v1213
        %v1449 = vpop.f32.mrf.mxu0
        %v1450 = vadd.f32 0.0, %v1449
        %v1451 = vpop.f32.mrf.mxu0
        %v1452 = vpop.f32.mrf.mxu0
        %v1453 = vadd.f32 0.0, %v1452
        %v1454 = vpop.f32.mrf.mxu0
        %1455 = vmatprep.mubr.bf16.mxu0 0
        %1456 = vmatmul.mubr.bf16.gmra.mxu0 %v1216
        %v1457 = vpop.f32.mrf.mxu0
        %v1458 = vadd.f32 0.0, %v1457
        %v1459 = vpop.f32.mrf.mxu0
        %v1460 = vpop.f32.mrf.mxu0
        %v1461 = vadd.f32 0.0, %v1460
        %v1462 = vpop.f32.mrf.mxu0
        %1463 = vmatprep.mubr.bf16.mxu0 0
        %1464 = vmatmul.mubr.bf16.gmra.mxu0 %v1219
        %v1465 = vpop.f32.mrf.mxu0
        %v1466 = vadd.f32 0.0, %v1465
        %v1467 = vpop.f32.mrf.mxu0
        %v1468 = vpop.f32.mrf.mxu0
        %v1469 = vadd.f32 0.0, %v1468
        %v1470 = vpop.f32.mrf.mxu0
        %1471 = vmatprep.mubr.bf16.mxu0 0
        %1472 = vmatmul.mubr.bf16.gmra.mxu0 %v1222
        %v1473 = vpop.f32.mrf.mxu0
        %v1474 = vadd.f32 0.0, %v1473
        %v1475 = vpop.f32.mrf.mxu0
        %v1476 = vpop.f32.mrf.mxu0
        %v1477 = vadd.f32 0.0, %v1476
        %v1478 = vpop.f32.mrf.mxu0
        %1479 = vmatprep.mubr.bf16.mxu0 0
        %1480 = vmatmul.mubr.bf16.gmra.mxu0 %v1225
        %v1481 = vpop.f32.mrf.mxu0
        %v1482 = vadd.f32 0.0, %v1481
        %v1483 = vpop.f32.mrf.mxu0
        %v1484 = vpop.f32.mrf.mxu0
        %v1485 = vadd.f32 0.0, %v1484
        %v1486 = vpop.f32.mrf.mxu0
        %1487 = vmatprep.mubr.bf16.mxu0 0
        %1488 = vmatmul.mubr.bf16.gmra.mxu0 %v1228
        %v1489 = vpop.f32.mrf.mxu0
        %v1490 = vadd.f32 0.0, %v1489
        %v1491 = vpop.f32.mrf.mxu0
        %v1492 = vpop.f32.mrf.mxu0
        %v1493 = vadd.f32 0.0, %v1492
        %v1494 = vpop.f32.mrf.mxu0
        %1495 = vmatprep.mubr.bf16.mxu0 0
        %1496 = vmatmul.mubr.bf16.gmra.mxu0 %v1231
        %v1497 = vpop.f32.mrf.mxu0
        %v1498 = vadd.f32 0.0, %v1497
        %v1499 = vpop.f32.mrf.mxu0
        %v1500 = vpop.f32.mrf.mxu0
        %v1501 = vadd.f32 0.0, %v1500
        %v1502 = vpop.f32.mrf.mxu0
        %1503 = vmatprep.mubr.bf16.mxu0 0
        %1504 = vmatmul.mubr.bf16.gmra.mxu0 %v1234
        %v1505 = vpop.f32.mrf.mxu0
        %v1506 = vadd.f32 0.0, %v1505
        %v1507 = vpop.f32.mrf.mxu0
        %v1508 = vpop.f32.mrf.mxu0
        %v1509 = vadd.f32 0.0, %v1508
        %v1510 = vpop.f32.mrf.mxu0
        %1511 = vmatprep.mubr.bf16.mxu0 0
        %1512 = vmatmul.mubr.bf16.gmra.mxu0 %v1237
        %v1513 = vpop.f32.mrf.mxu0
        %v1514 = vadd.f32 0.0, %v1513
        %v1515 = vpop.f32.mrf.mxu0
        %v1516 = vpop.f32.mrf.mxu0
        %v1517 = vadd.f32 0.0, %v1516
        %v1518 = vpop.f32.mrf.mxu0
        %1519 = vmatprep.mubr.bf16.mxu0 0
        %1520 = vmatmul.mubr.bf16.gmra.mxu0 %v1240
        %v1521 = vpop.f32.mrf.mxu0
        %v1522 = vadd.f32 0.0, %v1521
        %v1523 = vpop.f32.mrf.mxu0
        %v1524 = vpop.f32.mrf.mxu0
        %v1525 = vadd.f32 0.0, %v1524
        %v1526 = vpop.f32.mrf.mxu0
        %1527 = vmatprep.mubr.bf16.mxu0 0
        %1528 = vmatmul.mubr.bf16.gmra.mxu0 %v1243
        %v1529 = vpop.f32.mrf.mxu0
        %v1530 = vadd.f32 0.0, %v1529
        %v1531 = vpop.f32.mrf.mxu0
        %v1532 = vpop.f32.mrf.mxu0
        %v1533 = vadd.f32 0.0, %v1532
        %v1534 = vpop.f32.mrf.mxu0
        %1535 = vdwg.mxu0
        %v1536 = vadd.f32 %v867, %v1289
        %v1537 = vadd.f32 %v869, %v1291
        %v1538 = vadd.f32 %v1020, %v1442
        %v1539 = vadd.f32 %v871, %v1293
        %v1540 = vadd.f32 %v873, %v1295
        %v1541 = vadd.f32 %v1023, %v1445
        %v1542 = vadd.f32 %v877, %v1299
        %v1543 = vadd.f32 %v879, %v1301
        %v1544 = vadd.f32 %v1028, %v1450
        %v1545 = vadd.f32 %v881, %v1303
        %v1546 = vadd.f32 %v883, %v1305
        %v1547 = vadd.f32 %v1031, %v1453
        %v1548 = vadd.f32 %v887, %v1309
        %v1549 = vadd.f32 %v889, %v1311
        %v1550 = vadd.f32 %v1036, %v1458
        %v1551 = vadd.f32 %v891, %v1313
        %v1552 = vadd.f32 %v893, %v1315
        %v1553 = vadd.f32 %v1039, %v1461
        %v1554 = vadd.f32 %v897, %v1319
        %v1555 = vadd.f32 %v899, %v1321
        %v1556 = vadd.f32 %v1044, %v1466
        %v1557 = vadd.f32 %v901, %v1323
        %v1558 = vadd.f32 %v903, %v1325
        %v1559 = vadd.f32 %v1047, %v1469
        %v1560 = vadd.f32 %v907, %v1329
        %v1561 = vadd.f32 %v909, %v1331
        %v1562 = vadd.f32 %v1052, %v1474
        %v1563 = vadd.f32 %v911, %v1333
        %v1564 = vadd.f32 %v913, %v1335
        %v1565 = vadd.f32 %v1055, %v1477
        %v1566 = vadd.f32 %v917, %v1339
        %v1567 = vadd.f32 %v919, %v1341
        %v1568 = vadd.f32 %v1060, %v1482
        %v1569 = vadd.f32 %v921, %v1343
        %v1570 = vadd.f32 %v923, %v1345
        %v1571 = vadd.f32 %v1063, %v1485
        %v1572 = vadd.f32 %v927, %v1349
        %v1573 = vadd.f32 %v929, %v1351
        %v1574 = vadd.f32 %v1068, %v1490
        %v1575 = vadd.f32 %v931, %v1353
        %v1576 = vadd.f32 %v933, %v1355
        %v1577 = vadd.f32 %v1071, %v1493
        %v1578 = vadd.f32 %v937, %v1359
        %v1579 = vadd.f32 %v939, %v1361
        %v1580 = vadd.f32 %v1076, %v1498
        %v1581 = vadd.f32 %v941, %v1363
        %v1582 = vadd.f32 %v943, %v1365
        %v1583 = vadd.f32 %v1079, %v1501
        %v1584 = vadd.f32 %v947, %v1369
        %v1585 = vadd.f32 %v949, %v1371
        %v1586 = vadd.f32 %v1084, %v1506
        %v1587 = vadd.f32 %v951, %v1373
        %v1588 = vadd.f32 %v953, %v1375
        %v1589 = vadd.f32 %v1087, %v1509
        %v1590 = vadd.f32 %v957, %v1379
        %v1591 = vadd.f32 %v959, %v1381
        %v1592 = vadd.f32 %v1092, %v1514
        %v1593 = vadd.f32 %v961, %v1383
        %v1594 = vadd.f32 %v963, %v1385
        %v1595 = vadd.f32 %v1095, %v1517
        %v1596 = vadd.f32 %v967, %v1389
        %v1597 = vadd.f32 %v969, %v1391
        %v1598 = vadd.f32 %v1100, %v1522
        %v1599 = vadd.f32 %v971, %v1393
        %v1600 = vadd.f32 %v973, %v1395
        %v1601 = vadd.f32 %v1103, %v1525
        %v1602 = vadd.f32 %v977, %v1399
        %v1603 = vadd.f32 %v979, %v1401
        %v1604 = vadd.f32 %v1108, %v1530
        %v1605 = vadd.f32 %v981, %v1403
        %v1606 = vadd.f32 %v983, %v1405
        %v1607 = vadd.f32 %v1111, %v1533
        %vm1632 = vcmask 1046528
        %v1633 = vrot.slane %v1537, 1
        %v1634 = vrot.slane %v1540, 1
        %v1635 = vsel %vm1632, %v1633, %v1634
        %v1636 = vrot.slane %v1543, 1
        %v1637 = vsel %vm1632, %v1634, %v1636
        %v1638 = vrot.slane %v1546, 1
        %v1639 = vsel %vm1632, %v1636, %v1638
        %v1640 = vrot.slane %v1549, 1
        %v1641 = vsel %vm1632, %v1638, %v1640
        %v1642 = vrot.slane %v1552, 1
        %v1643 = vsel %vm1632, %v1640, %v1642
        %v1644 = vrot.slane %v1555, 1
        %v1645 = vsel %vm1632, %v1642, %v1644
        %v1646 = vrot.slane %v1558, 1
        %v1647 = vsel %vm1632, %v1644, %v1646
        %v1648 = vrot.slane %v1561, 1
        %v1649 = vsel %vm1632, %v1646, %v1648
        %v1650 = vrot.slane %v1564, 1
        %v1651 = vsel %vm1632, %v1648, %v1650
        %v1652 = vrot.slane %v1567, 1
        %v1653 = vsel %vm1632, %v1650, %v1652
        %v1654 = vrot.slane %v1570, 1
        %v1655 = vsel %vm1632, %v1652, %v1654
        %v1656 = vrot.slane %v1573, 1
        %v1657 = vsel %vm1632, %v1654, %v1656
        %v1658 = vrot.slane %v1576, 1
        %v1659 = vsel %vm1632, %v1656, %v1658
        %v1660 = vrot.slane %v1579, 1
        %v1661 = vsel %vm1632, %v1658, %v1660
        %v1662 = vrot.slane %v1582, 1
        %v1663 = vsel %vm1632, %v1660, %v1662
        %v1664 = vrot.slane %v1585, 1
        %v1665 = vsel %vm1632, %v1662, %v1664
        %v1666 = vrot.slane %v1588, 1
        %v1667 = vsel %vm1632, %v1664, %v1666
        %v1668 = vrot.slane %v1591, 1
        %v1669 = vsel %vm1632, %v1666, %v1668
        %v1670 = vrot.slane %v1594, 1
        %v1671 = vsel %vm1632, %v1668, %v1670
        %v1672 = vrot.slane %v1597, 1
        %v1673 = vsel %vm1632, %v1670, %v1672
        %v1674 = vrot.slane %v1600, 1
        %v1675 = vsel %vm1632, %v1672, %v1674
        %v1676 = vrot.slane %v1603, 1
        %v1677 = vsel %vm1632, %v1674, %v1676
        %v1678 = vrot.slane %v1606, 1
        %v1679 = vsel %vm1632, %v1676, %v1678
        %v1704 = vadd.f32 %v1536, %v1635
        %v1705 = vadd.f32 %v1539, %v1637
        %v1706 = vadd.f32 %v1542, %v1639
        %v1707 = vadd.f32 %v1545, %v1641
        %v1708 = vadd.f32 %v1548, %v1643
        %v1709 = vadd.f32 %v1551, %v1645
        %v1710 = vadd.f32 %v1554, %v1647
        %v1711 = vadd.f32 %v1557, %v1649
        %v1712 = vadd.f32 %v1560, %v1651
        %v1713 = vadd.f32 %v1563, %v1653
        %v1714 = vadd.f32 %v1566, %v1655
        %v1715 = vadd.f32 %v1569, %v1657
        %v1716 = vadd.f32 %v1572, %v1659
        %v1717 = vadd.f32 %v1575, %v1661
        %v1718 = vadd.f32 %v1578, %v1663
        %v1719 = vadd.f32 %v1581, %v1665
        %v1720 = vadd.f32 %v1584, %v1667
        %v1721 = vadd.f32 %v1587, %v1669
        %v1722 = vadd.f32 %v1590, %v1671
        %v1723 = vadd.f32 %v1593, %v1673
        %v1724 = vadd.f32 %v1596, %v1675
        %v1725 = vadd.f32 %v1599, %v1677
        %v1726 = vadd.f32 %v1602, %v1679
        %v1727 = vadd.f32 %v1605, %v1678
        %vm1752 = vcmask 1045504
        %v1753 = vrot.slane %v1538, 2
        %v1754 = vrot.slane %v1541, 2
        %v1755 = vsel %vm1752, %v1753, %v1754
        %v1756 = vrot.slane %v1544, 2
        %v1757 = vsel %vm1752, %v1754, %v1756
        %v1758 = vrot.slane %v1547, 2
        %v1759 = vsel %vm1752, %v1756, %v1758
        %v1760 = vrot.slane %v1550, 2
        %v1761 = vsel %vm1752, %v1758, %v1760
        %v1762 = vrot.slane %v1553, 2
        %v1763 = vsel %vm1752, %v1760, %v1762
        %v1764 = vrot.slane %v1556, 2
        %v1765 = vsel %vm1752, %v1762, %v1764
        %v1766 = vrot.slane %v1559, 2
        %v1767 = vsel %vm1752, %v1764, %v1766
        %v1768 = vrot.slane %v1562, 2
        %v1769 = vsel %vm1752, %v1766, %v1768
        %v1770 = vrot.slane %v1565, 2
        %v1771 = vsel %vm1752, %v1768, %v1770
        %v1772 = vrot.slane %v1568, 2
        %v1773 = vsel %vm1752, %v1770, %v1772
        %v1774 = vrot.slane %v1571, 2
        %v1775 = vsel %vm1752, %v1772, %v1774
        %v1776 = vrot.slane %v1574, 2
        %v1777 = vsel %vm1752, %v1774, %v1776
        %v1778 = vrot.slane %v1577, 2
        %v1779 = vsel %vm1752, %v1776, %v1778
        %v1780 = vrot.slane %v1580, 2
        %v1781 = vsel %vm1752, %v1778, %v1780
        %v1782 = vrot.slane %v1583, 2
        %v1783 = vsel %vm1752, %v1780, %v1782
        %v1784 = vrot.slane %v1586, 2
        %v1785 = vsel %vm1752, %v1782, %v1784
        %v1786 = vrot.slane %v1589, 2
        %v1787 = vsel %vm1752, %v1784, %v1786
        %v1788 = vrot.slane %v1592, 2
        %v1789 = vsel %vm1752, %v1786, %v1788
        %v1790 = vrot.slane %v1595, 2
        %v1791 = vsel %vm1752, %v1788, %v1790
        %v1792 = vrot.slane %v1598, 2
        %v1793 = vsel %vm1752, %v1790, %v1792
        %v1794 = vrot.slane %v1601, 2
        %v1795 = vsel %vm1752, %v1792, %v1794
        %v1796 = vrot.slane %v1604, 2
        %v1797 = vsel %vm1752, %v1794, %v1796
        %v1798 = vrot.slane %v1607, 2
        %v1799 = vsel %vm1752, %v1796, %v1798
        %v1824 = vadd.f32 %v1704, %v1755
        %v1825 = vadd.f32 %v1705, %v1757
        %v1826 = vadd.f32 %v1706, %v1759
        %v1827 = vadd.f32 %v1707, %v1761
        %v1828 = vadd.f32 %v1708, %v1763
        %v1829 = vadd.f32 %v1709, %v1765
        %v1830 = vadd.f32 %v1710, %v1767
        %v1831 = vadd.f32 %v1711, %v1769
        %v1832 = vadd.f32 %v1712, %v1771
        %v1833 = vadd.f32 %v1713, %v1773
        %v1834 = vadd.f32 %v1714, %v1775
        %v1835 = vadd.f32 %v1715, %v1777
        %v1836 = vadd.f32 %v1716, %v1779
        %v1837 = vadd.f32 %v1717, %v1781
        %v1838 = vadd.f32 %v1718, %v1783
        %v1839 = vadd.f32 %v1719, %v1785
        %v1840 = vadd.f32 %v1720, %v1787
        %v1841 = vadd.f32 %v1721, %v1789
        %v1842 = vadd.f32 %v1722, %v1791
        %v1843 = vadd.f32 %v1723, %v1793
        %v1844 = vadd.f32 %v1724, %v1795
        %v1845 = vadd.f32 %v1725, %v1797
        %v1846 = vadd.f32 %v1726, %v1799
        %v1847 = vadd.f32 %v1727, %v1798
        %v1848 = vmax.f32 %v1824, 0.0
        %v1849 = vmax.f32 %v1825, 0.0
        %v1850 = vmax.f32 %v1826, 0.0
        %v1851 = vmax.f32 %v1827, 0.0
        %v1852 = vmax.f32 %v1828, 0.0
        %v1853 = vmax.f32 %v1829, 0.0
        %v1854 = vmax.f32 %v1830, 0.0
        %v1855 = vmax.f32 %v1831, 0.0
        %v1856 = vmax.f32 %v1832, 0.0
        %v1857 = vmax.f32 %v1833, 0.0
        %v1858 = vmax.f32 %v1834, 0.0
        %v1859 = vmax.f32 %v1835, 0.0
        %v1860 = vmax.f32 %v1836, 0.0
        %v1861 = vmax.f32 %v1837, 0.0
        %v1862 = vmax.f32 %v1838, 0.0
        %v1863 = vmax.f32 %v1839, 0.0
        %v1864 = vmax.f32 %v1840, 0.0
        %v1865 = vmax.f32 %v1841, 0.0
        %v1866 = vmax.f32 %v1842, 0.0
        %v1867 = vmax.f32 %v1843, 0.0
        %v1868 = vmax.f32 %v1844, 0.0
        %v1869 = vmax.f32 %v1845, 0.0
        %v1870 = vmax.f32 %v1846, 0.0
        %v1871 = vmax.f32 %v1847, 0.0
        %1872 = vst [vmem:[%s236] sm:$0xff] %v1848
        %1873 = vst [vmem:[%s236 + $0x8] sm:$0xff] %v1849
        %1874 = vst [vmem:[%s236 + $0x10] sm:$0xff] %v1850
        %1875 = vst [vmem:[%s236 + $0x18] sm:$0xff] %v1851
        %1876 = vst [vmem:[%s236 + $0x20] sm:$0xff] %v1852
        %1877 = vst [vmem:[%s236 + $0x28] sm:$0xff] %v1853
        %1878 = vst [vmem:[%s236 + $0x30] sm:$0xff] %v1854
        %1879 = vst [vmem:[%s236 + $0x38] sm:$0xff] %v1855
        %1880 = vst [vmem:[%s236 + $0x40] sm:$0xff] %v1856
        %1881 = vst [vmem:[%s236 + $0x48] sm:$0xff] %v1857
        %1882 = vst [vmem:[%s236 + $0x50] sm:$0xff] %v1858
        %1883 = vst [vmem:[%s236 + $0x58] sm:$0xff] %v1859
        %1884 = vst [vmem:[%s236 + $0x60] sm:$0xff] %v1860
        %1885 = vst [vmem:[%s236 + $0x68] sm:$0xff] %v1861
        %1886 = vst [vmem:[%s236 + $0x70] sm:$0xff] %v1862
        %1887 = vst [vmem:[%s236 + $0x78] sm:$0xff] %v1863
        %1888 = vst [vmem:[%s236 + $0x80] sm:$0xff] %v1864
        %1889 = vst [vmem:[%s236 + $0x88] sm:$0xff] %v1865
        %1890 = vst [vmem:[%s236 + $0x90] sm:$0xff] %v1866
        %1891 = vst [vmem:[%s236 + $0x98] sm:$0xff] %v1867
        %1892 = vst [vmem:[%s236 + $0xa0] sm:$0xff] %v1868
        %1893 = vst [vmem:[%s236 + $0xa8] sm:$0xff] %v1869
        %1894 = vst [vmem:[%s236 + $0xb0] sm:$0xff] %v1870
        %1895 = vst [vmem:[%s236 + $0xb8] sm:$0x3f] %v1871
        %1896 = vst [vmem:[%s236 + $0xbe] sm:$0x3] 0.0
        %s1897 = sand.u32 %s120, 1
        %s1898 = scalar_lea.sflag [#allocation4], %s1897
        %s1899 = sand.u32 %s120, 1
        %s1900 = smul.addr %s1899, 192
        %s1901 = scalar_lea.vmem [#allocation3], %s1900
        // Predicated region
        $region33: #{tpu_custom_call.1} parent=31 // pred_check
          %p1902 = pneg %p130
        $region34: #{tpu_custom_call.1} parent=31 // pred_check_branch
          %1904 = sbr.rel (%p1902) target = $region36
        $region35: #{tpu_custom_call.1} parent=31 // pred_region
          %s1905 = smul.u32 24, %s22
          %s1907 = ssub.s32 3072, 3072
          %1908 = vsyncadd %s1898, %s1907
          %s1909 = smul.addr %s21, 48
          %s1910 = sadd.s32 %s1905, %s1909
          %s1911 = smul.addr %s1910, 128
          %s1912 = scalar_lea.hbm %s3, %s1911
          %s1913 = sshll.u32 %s1901, 4
          %s1914 = int_to_ptr.vmem [resolvable:$true] %s1913
          %1919 = dma.vmem_to_hbm [thread:$0]  %s1914, 3072, %s1912, %s1898, 128, 128, 8
        $region36: #{tpu_custom_call.1} parent=31 // pred_fallthru
          _
      $region32: #{tpu_custom_call.1} parent=5 // pred_fallthru
        _
      %p1920 = scmp.le.s32.totalorder 2, %s12
      // Predicated region
      $region37: #{tpu_custom_call.1} parent=5 // pred_check
        %p1921 = pneg %p1920
      $region38: #{tpu_custom_call.1} parent=5 // pred_check_branch
        %1923 = sbr.rel (%p1921) target = $region40
      $region39: #{tpu_custom_call.1} parent=5 // pred_region
        %s1924 = ssub.s32 %s12, 2
        // Predicated region
        $region41: #{tpu_custom_call.1} parent=39 // pred_check
          %p1925 = pneg %p136
        $region42: #{tpu_custom_call.1} parent=39 // pred_check_branch
          %1927 = sbr.rel (%p1925) target = $region44
        $region43: #{tpu_custom_call.1} parent=39 // pred_region
          %s1928 = sand.u32 %s121, 1
          %s1929 = scalar_lea.sflag [#allocation4], %s1928
          %s1930 = sand.u32 %s121, 1
          %s1931 = smul.addr %s1930, 192
          %s1932 = scalar_lea.vmem [#allocation3], %s1931
          %1933 = dma.done %s1929, 3072
        $region44: #{tpu_custom_call.1} parent=39 // pred_fallthru
          _
      $region40: #{tpu_custom_call.1} parent=5 // pred_fallthru
        _
    $region6: #{tpu_custom_call.1} parent=1 // loop_footer
      %s16 = sadd.s32 1, %s12
    $region7: #{tpu_custom_call.1} parent=1 // loop_footer_branch
      %11 = sbr.rel target = $region3
    $region8: #{tpu_custom_call.1} parent=1 // loop_exit
      _
    %1934 = vsyncpa [#allocation4], 1
    %s1935 = scalar_lea.sflag [#allocation4], 1
    %1936 = vsyncpa %s1935, 1

</llo_original>
